<compile_context>
chip_gen: v7x
topology: tpu7x:2x2x1
jax: 0.10.0
libtpu: 0.0.40
codegen_flags: <defaults>
</compile_context>

<pallas_src>
import jax
import jax.numpy as jnp
from jax.experimental import pallas as pl
from jax.experimental.pallas import tpu as pltpu

INPUT_DIM = 2
HIDDEN = 256
OUTPUT_DIM = 2
LN_EPS = 1e-5

# Column layout of the packed small-parameter slab (HIDDEN, 8):
#   0: w1[:, 0]   1: w1[:, 1]   2: b1   3: b2'
#   4: b3'           (rows 0..OUTPUT_DIM-1, rest zero)
#   5: rowsum(W3')   (rows 0..OUTPUT_DIM-1, rest zero)
#   6,7: unused padding


def policy_mean_kernel(x_ref,    # (INPUT_DIM, tb)   transposed input, batch on lanes
                       p_ref,    # (HIDDEN, 8)       packed small params (see above)
                       w2_ref,   # (HIDDEN, HIDDEN)  W2' = W2 * g1   (LN1 affine folded)
                       w3_ref,   # (OUTPUT_DIM, HIDDEN) W3' = W3 * g2 (LN2 affine folded)
                       o_ref):   # (OUTPUT_DIM, tb)  lane-dense output slab
    x = x_ref[...]
    p = p_ref[...]
    w1c0 = p[:, 0:1]
    w1c1 = p[:, 1:2]
    b1 = p[:, 2:3]
    b2 = p[:, 3:4]
    b3 = p[0:OUTPUT_DIM, 4:5]
    rs3 = p[0:OUTPUT_DIM, 5:6]

    # ---- Block 1: Linear(2->256) as two broadcast FMAs (K=2 is too shallow for the
    # MXU), ReLU, LayerNorm with one-pass statistics (affine folded into W2'/b2').
    h = w1c0 * x[0:1, :] + w1c1 * x[1:2, :] + b1
    h = jnp.maximum(h, 0.0)
    mu1 = jnp.mean(h, axis=0, keepdims=True)
    msq1 = jnp.mean(h * h, axis=0, keepdims=True)
    var1 = jnp.maximum(msq1 - mu1 * mu1, 0.0)
    h = (h - mu1) * jax.lax.rsqrt(var1 + LN_EPS)

    # ---- Block 2: Linear(256->256) on the MXU (M=256, K=256, N=tb), ReLU.
    # Only the LN2 *statistics* are computed here (one pass); the subtract/scale is
    # deferred past the 2-row head matmul below.
    h = jnp.dot(w2_ref[...], h.astype(w2_ref.dtype),
                preferred_element_type=jnp.float32) + b2
    h = jnp.maximum(h, 0.0)
    mu2 = jnp.mean(h, axis=0, keepdims=True)
    msq2 = jnp.mean(h * h, axis=0, keepdims=True)
    var2 = jnp.maximum(msq2 - mu2 * mu2, 0.0)
    inv2 = jax.lax.rsqrt(var2 + LN_EPS)

    # ---- Head: Linear(256->2) with LN2 deferred.  Per column j:
    #   W3' @ ((h - mu2_j)/sig2_j) + b3' = (W3' @ h - rowsum(W3')*mu2_j)/sig2_j + b3'
    # All elementwise work after the matmul is on the (OUTPUT_DIM, tb) slab only.
    y = jnp.dot(w3_ref[...], h, preferred_element_type=jnp.float32)
    y = (y - rs3 * mu2) * inv2 + b3
    o_ref[...] = y.astype(o_ref.dtype)


def _has_two_tensorcores():
    """Best-effort v7x (2 TC/chip) detection; safe fallback = single TC."""
    try:
        kind = jax.devices()[0].device_kind.lower()
    except Exception:
        return False
    return ("v7" in kind) or ("7x" in kind)


def _largest_tile(bp, cap):
    """Largest multiple-of-128 divisor of bp that is <= cap (bp is a multiple of 128)."""
    cap = max(128, min(int(cap), bp))
    best = 128
    for t in range(128, cap + 1, 128):
        if bp % t == 0:
            best = t
    return best


def diag_gauss_policy(x, params, *, tb=None, mxu_dtype=jnp.float32):
    """Forward pass of DiagGaussPolicyNW.

    x:      (B, INPUT_DIM) float32
    params: PyTorch-layout parameters (weights are (out, in)), see init_params().
    tb:     batch tile (lane dim); None = generation-aware auto-select.
    mxu_dtype: dtype of the 256x256 matmul operands (jnp.bfloat16 is worthwhile on
               v5e but loosens accuracy below the 1e-4 test tolerance).
    Returns (mean, std): mean (B, OUTPUT_DIM), std (OUTPUT_DIM,) = exp(log_std).

    Note: for RL rollout workloads, batch many environments per call - at tiny B the
    call is dominated by the fixed launch + weight-DMA cost, not by this kernel.
    """
    B, D = x.shape
    assert D == INPUT_DIM

    # ---- wrapper-side parameter prep (tiny, done once per call by XLA) -------------
    # Fold LayerNorm affines into the following Linear (exact algebra):
    #   W2' = W2 * g1[None,:],  b2' = W2 @ be1 + b2
    #   W3' = W3 * g2[None,:],  b3' = W3 @ be2 + b3
    # and precompute rowsum(W3') for the deferred LN2 shift.
    w1 = params["w1"]                                        # (H, 2)
    b1 = params["b1"]                                        # (H,)
    w2 = params["w2"] * params["g1"][None, :]                # (H, H)
    b2 = params["w2"] @ params["be1"] + params["b2"]         # (H,)
    w3 = params["w3"] * params["g2"][None, :]                # (out, H)
    b3 = params["w3"] @ params["be2"] + params["b3"]         # (out,)
    rs3 = jnp.sum(w3, axis=1)                                # (out,)

    small = jnp.zeros((HIDDEN, 8), jnp.float32)
    small = small.at[:, 0].set(w1[:, 0])
    small = small.at[:, 1].set(w1[:, 1])
    small = small.at[:, 2].set(b1)
    small = small.at[:, 3].set(b2)
    small = small.at[:OUTPUT_DIM, 4].set(b3)
    small = small.at[:OUTPUT_DIM, 5].set(rs3)

    w2 = w2.astype(mxu_dtype)
    w3 = w3.astype(jnp.float32)

    # ---- batch padding + generation-aware tile selection ----------------------------
    Bp = ((B + 127) // 128) * 128                            # pad batch to lane multiple
    if tb is None:
        if _has_two_tensorcores() and Bp >= 256:
            tb = _largest_tile(Bp, Bp // 2)                  # >= 2 "parallel" steps (v7x)
        else:
            tb = _largest_tile(Bp, 2048)                     # fewest steps (v5e/v6e)
    elif tb % 128 != 0 or Bp % tb != 0:
        tb = _largest_tile(Bp, max(tb, 128))

    x_t = x.T.astype(jnp.float32)                            # (INPUT_DIM, B): batch on lanes
    if Bp != B:
        x_t = jnp.pad(x_t, ((0, 0), (0, Bp - B)))            # zero columns; sliced off below

    def const(shape):
        # Small parameter tensors: full block, constant index -> fetched once.
        return pl.BlockSpec(shape, lambda i: (0, 0))

    out_t = pl.pallas_call(
        policy_mean_kernel,
        out_shape=jax.ShapeDtypeStruct((OUTPUT_DIM, Bp), jnp.float32),
        grid_spec=pltpu.PrefetchScalarGridSpec(
            num_scalar_prefetch=0,
            grid=(Bp // tb,),
            in_specs=[
                pl.BlockSpec((INPUT_DIM, tb), lambda i: (0, i)),   # x (transposed)
                const((HIDDEN, 8)),                                # packed small params
                const((HIDDEN, HIDDEN)),                           # W2'
                const((OUTPUT_DIM, HIDDEN)),                       # W3'
            ],
            out_specs=pl.BlockSpec((OUTPUT_DIM, tb), lambda i: (0, i)),
        ),
        compiler_params=pltpu.CompilerParams(
            dimension_semantics=("parallel",)),
    )(x_t, small, w2, w3)

    mean = out_t[:, :B].T                                    # (B, OUTPUT_DIM)
    std = jnp.exp(params["log_std"])                         # (OUTPUT_DIM,)
    return mean, std


def init_params(key):
    """Deterministic synthetic parameters matching the PyTorch module shapes.

    Linear weights kept in PyTorch (out, in) layout.  LayerNorm affines are made
    non-trivial so the wrapper-side fold is actually exercised."""
    ks = jax.random.split(key, 10)

    def lin(kw, kb, fan_in, fan_out):
        bound = 1.0 / jnp.sqrt(fan_in)
        w = jax.random.uniform(kw, (fan_out, fan_in), jnp.float32, -bound, bound)
        b = jax.random.uniform(kb, (fan_out,), jnp.float32, -bound, bound)
        return w, b

    w1, b1 = lin(ks[0], ks[1], INPUT_DIM, HIDDEN)
    w2, b2 = lin(ks[2], ks[3], HIDDEN, HIDDEN)
    w3, b3 = lin(ks[4], ks[5], HIDDEN, OUTPUT_DIM)
    return {
        "w1": w1, "b1": b1,
        "g1": 1.0 + 0.1 * jax.random.normal(ks[6], (HIDDEN,), jnp.float32),
        "be1": 0.05 * jax.random.normal(ks[7], (HIDDEN,), jnp.float32),
        "w2": w2, "b2": b2,
        "g2": 1.0 + 0.1 * jax.random.normal(ks[8], (HIDDEN,), jnp.float32),
        "be2": 0.05 * jax.random.normal(ks[9], (HIDDEN,), jnp.float32),
        "w3": w3, "b3": b3,
        "log_std": jnp.zeros((OUTPUT_DIM,), jnp.float32),    # log_std_init = 0.0
    }


def diag_gauss_policy_ref(x, p):
    """Pure-JAX reference of the PyTorch forward (mean of the Normal)."""
    h = jnp.maximum(x @ p["w1"].T + p["b1"], 0.0)
    mu = h.mean(-1, keepdims=True)
    d = h - mu
    h = d / jnp.sqrt((d * d).mean(-1, keepdims=True) + LN_EPS)
    h = h * p["g1"] + p["be1"]

    h = jnp.maximum(h @ p["w2"].T + p["b2"], 0.0)
    mu = h.mean(-1, keepdims=True)
    d = h - mu
    h = d / jnp.sqrt((d * d).mean(-1, keepdims=True) + LN_EPS)
    h = h * p["g2"] + p["be2"]

    return h @ p["w3"].T + p["b3"]


if __name__ == "__main__":
    key = jax.random.PRNGKey(0)
    kp, kx = jax.random.split(key)
    params = init_params(kp)

    # Aligned batch: exercises the generation-aware auto tile selection.
    B = 256
    x = jax.random.normal(kx, (B, INPUT_DIM), jnp.float32)
    mean, std = diag_gauss_policy(x, params)
    mean = jax.block_until_ready(mean)
    ref = diag_gauss_policy_ref(x, params)
    assert mean.shape == (B, OUTPUT_DIM)
    assert std.shape == (OUTPUT_DIM,)
    err = float(jnp.max(jnp.abs(mean - ref)))
    assert jnp.allclose(mean, ref, atol=1e-4, rtol=1e-4), err
    assert jnp.allclose(std, jnp.exp(params["log_std"]))

    # Ragged batch: exercises the pad-to-128 path (replaces the old tb=B fallback).
    B2 = 200
    x2 = jax.random.normal(jax.random.PRNGKey(1), (B2, INPUT_DIM), jnp.float32)
    mean2, _ = diag_gauss_policy(x2, params)
    mean2 = jax.block_until_ready(mean2)
    ref2 = diag_gauss_policy_ref(x2, params)
    assert mean2.shape == (B2, OUTPUT_DIM)
    err2 = float(jnp.max(jnp.abs(mean2 - ref2)))
    assert jnp.allclose(mean2, ref2, atol=1e-4, rtol=1e-4), err2

    # TODO(synk): rsample / log_prob / entropy of torch.distributions.Normal are
    # host-level stochastic ops on top of (mean, std) and are not kernelized here.
    print("KERNEL_OK")
</pallas_src>

<mosaic_0001>
module attributes {stable_mosaic.version = 11 : i64} {
  func.func @policy_mean_kernel(%arg0: i32, %arg1: memref<2x256xf32, #tpu.memory_space<vmem>>, %arg2: memref<256x8xf32, #tpu.memory_space<vmem>>, %arg3: memref<256x256xf32, #tpu.memory_space<vmem>>, %arg4: memref<2x256xf32, #tpu.memory_space<vmem>>, %arg5: memref<2x256xf32, #tpu.memory_space<vmem>>) attributes {dimension_semantics = [#tpu.dimension_semantics<parallel>], iteration_bounds = array<i64: 1>, scalar_prefetch = 0 : i64, scratch_operands = 0 : i64, tpu.core_type = #tpu.core_type<tc>, window_params = [{transform_indices = @transform_0, window_bounds = array<i64: 2, 256>}, {pipeline_mode = #tpu.pipeline_mode<synchronous>, transform_indices = @transform_1, window_bounds = array<i64: 256, 8>}, {pipeline_mode = #tpu.pipeline_mode<synchronous>, transform_indices = @transform_2, window_bounds = array<i64: 256, 256>}, {pipeline_mode = #tpu.pipeline_mode<synchronous>, transform_indices = @transform_3, window_bounds = array<i64: 2, 256>}, {transform_indices = @transform_4, window_bounds = array<i64: 2, 256>}]} {
    %c0 = arith.constant 0 : index
    %c0_0 = arith.constant 0 : index
    %0 = vector.load %arg1[%c0, %c0_0] : memref<2x256xf32, #tpu.memory_space<vmem>>, vector<2x256xf32>
    %c0_1 = arith.constant 0 : index
    %c0_2 = arith.constant 0 : index
    %1 = vector.load %arg2[%c0_1, %c0_2] : memref<256x8xf32, #tpu.memory_space<vmem>>, vector<256x8xf32>
    %2 = vector.extract_strided_slice %1 {offsets = [0, 0], sizes = [256, 1], strides = [1, 1]} : vector<256x8xf32> to vector<256x1xf32>
    %3 = vector.extract_strided_slice %1 {offsets = [0, 1], sizes = [256, 1], strides = [1, 1]} : vector<256x8xf32> to vector<256x1xf32>
    %4 = vector.extract_strided_slice %1 {offsets = [0, 2], sizes = [256, 1], strides = [1, 1]} : vector<256x8xf32> to vector<256x1xf32>
    %5 = vector.extract_strided_slice %1 {offsets = [0, 3], sizes = [256, 1], strides = [1, 1]} : vector<256x8xf32> to vector<256x1xf32>
    %6 = vector.extract_strided_slice %1 {offsets = [0, 4], sizes = [2, 1], strides = [1, 1]} : vector<256x8xf32> to vector<2x1xf32>
    %7 = vector.extract_strided_slice %1 {offsets = [0, 5], sizes = [2, 1], strides = [1, 1]} : vector<256x8xf32> to vector<2x1xf32>
    %8 = vector.extract_strided_slice %0 {offsets = [0, 0], sizes = [1, 256], strides = [1, 1]} : vector<2x256xf32> to vector<1x256xf32>
    %9 = vector.broadcast %2 : vector<256x1xf32> to vector<256x256xf32>
    %10 = vector.broadcast %8 : vector<1x256xf32> to vector<256x256xf32>
    %11 = arith.mulf %9, %10 : vector<256x256xf32>
    %12 = vector.extract_strided_slice %0 {offsets = [1, 0], sizes = [1, 256], strides = [1, 1]} : vector<2x256xf32> to vector<1x256xf32>
    %13 = vector.broadcast %3 : vector<256x1xf32> to vector<256x256xf32>
    %14 = vector.broadcast %12 : vector<1x256xf32> to vector<256x256xf32>
    %15 = arith.mulf %13, %14 : vector<256x256xf32>
    %16 = arith.addf %11, %15 : vector<256x256xf32>
    %17 = vector.broadcast %4 : vector<256x1xf32> to vector<256x256xf32>
    %18 = arith.addf %16, %17 : vector<256x256xf32>
    %cst = arith.constant 0.000000e+00 : f32
    %19 = vector.broadcast %cst : f32 to vector<256x256xf32>
    %20 = arith.maximumf %18, %19 : vector<256x256xf32>
    %cst_3 = arith.constant dense<0.000000e+00> : vector<256xf32>
    %21 = vector.multi_reduction <add>, %20, %cst_3 [0] : vector<256x256xf32> to vector<256xf32>
    %22 = vector.shape_cast %21 : vector<256xf32> to vector<1x256xf32>
    %cst_4 = arith.constant 2.560000e+02 : f32
    %23 = vector.broadcast %cst_4 : f32 to vector<1x256xf32>
    %24 = arith.divf %22, %23 : vector<1x256xf32>
    %25 = arith.mulf %20, %20 : vector<256x256xf32>
    %cst_5 = arith.constant dense<0.000000e+00> : vector<256xf32>
    %26 = vector.multi_reduction <add>, %25, %cst_5 [0] : vector<256x256xf32> to vector<256xf32>
    %27 = vector.shape_cast %26 : vector<256xf32> to vector<1x256xf32>
    %cst_6 = arith.constant 2.560000e+02 : f32
    %28 = vector.broadcast %cst_6 : f32 to vector<1x256xf32>
    %29 = arith.divf %27, %28 : vector<1x256xf32>
    %30 = arith.mulf %24, %24 : vector<1x256xf32>
    %31 = arith.subf %29, %30 : vector<1x256xf32>
    %cst_7 = arith.constant 0.000000e+00 : f32
    %32 = vector.broadcast %cst_7 : f32 to vector<1x256xf32>
    %33 = arith.maximumf %31, %32 : vector<1x256xf32>
    %34 = vector.broadcast %24 : vector<1x256xf32> to vector<256x256xf32>
    %35 = arith.subf %20, %34 : vector<256x256xf32>
    %cst_8 = arith.constant 9.99999974E-6 : f32
    %36 = vector.broadcast %cst_8 : f32 to vector<1x256xf32>
    %37 = arith.addf %33, %36 : vector<1x256xf32>
    %38 = math.rsqrt %37 : vector<1x256xf32>
    %39 = vector.broadcast %38 : vector<1x256xf32> to vector<256x256xf32>
    %40 = arith.mulf %35, %39 : vector<256x256xf32>
    %c0_9 = arith.constant 0 : index
    %c0_10 = arith.constant 0 : index
    %41 = vector.load %arg3[%c0_9, %c0_10] : memref<256x256xf32, #tpu.memory_space<vmem>>, vector<256x256xf32>
    %cst_11 = arith.constant dense<0.000000e+00> : vector<256x256xf32>
    %42 = tpu.matmul %41, %40, %cst_11 {dimension_numbers = #tpu.dot_dimension_numbers<[1], [0], [0], [1], [0, 0, 1, 1], [], []>} : vector<256x256xf32>, vector<256x256xf32>, vector<256x256xf32> -> vector<256x256xf32>
    %43 = vector.broadcast %5 : vector<256x1xf32> to vector<256x256xf32>
    %44 = arith.addf %42, %43 : vector<256x256xf32>
    %cst_12 = arith.constant 0.000000e+00 : f32
    %45 = vector.broadcast %cst_12 : f32 to vector<256x256xf32>
    %46 = arith.maximumf %44, %45 : vector<256x256xf32>
    %cst_13 = arith.constant dense<0.000000e+00> : vector<256xf32>
    %47 = vector.multi_reduction <add>, %46, %cst_13 [0] : vector<256x256xf32> to vector<256xf32>
    %48 = vector.shape_cast %47 : vector<256xf32> to vector<1x256xf32>
    %cst_14 = arith.constant 2.560000e+02 : f32
    %49 = vector.broadcast %cst_14 : f32 to vector<1x256xf32>
    %50 = arith.divf %48, %49 : vector<1x256xf32>
    %51 = arith.mulf %46, %46 : vector<256x256xf32>
    %cst_15 = arith.constant dense<0.000000e+00> : vector<256xf32>
    %52 = vector.multi_reduction <add>, %51, %cst_15 [0] : vector<256x256xf32> to vector<256xf32>
    %53 = vector.shape_cast %52 : vector<256xf32> to vector<1x256xf32>
    %cst_16 = arith.constant 2.560000e+02 : f32
    %54 = vector.broadcast %cst_16 : f32 to vector<1x256xf32>
    %55 = arith.divf %53, %54 : vector<1x256xf32>
    %56 = arith.mulf %50, %50 : vector<1x256xf32>
    %57 = arith.subf %55, %56 : vector<1x256xf32>
    %cst_17 = arith.constant 0.000000e+00 : f32
    %58 = vector.broadcast %cst_17 : f32 to vector<1x256xf32>
    %59 = arith.maximumf %57, %58 : vector<1x256xf32>
    %cst_18 = arith.constant 9.99999974E-6 : f32
    %60 = vector.broadcast %cst_18 : f32 to vector<1x256xf32>
    %61 = arith.addf %59, %60 : vector<1x256xf32>
    %62 = math.rsqrt %61 : vector<1x256xf32>
    %c0_19 = arith.constant 0 : index
    %c0_20 = arith.constant 0 : index
    %63 = vector.load %arg4[%c0_19, %c0_20] : memref<2x256xf32, #tpu.memory_space<vmem>>, vector<2x256xf32>
    %cst_21 = arith.constant dense<0.000000e+00> : vector<2x256xf32>
    %64 = tpu.matmul %63, %46, %cst_21 {dimension_numbers = #tpu.dot_dimension_numbers<[1], [0], [0], [1], [0, 0, 1, 1], [], []>} : vector<2x256xf32>, vector<256x256xf32>, vector<2x256xf32> -> vector<2x256xf32>
    %65 = vector.broadcast %7 : vector<2x1xf32> to vector<2x256xf32>
    %66 = vector.broadcast %50 : vector<1x256xf32> to vector<2x256xf32>
    %67 = arith.mulf %65, %66 : vector<2x256xf32>
    %68 = arith.subf %64, %67 : vector<2x256xf32>
    %69 = vector.broadcast %62 : vector<1x256xf32> to vector<2x256xf32>
    %70 = arith.mulf %68, %69 : vector<2x256xf32>
    %71 = vector.broadcast %6 : vector<2x1xf32> to vector<2x256xf32>
    %72 = arith.addf %70, %71 : vector<2x256xf32>
    %c0_22 = arith.constant 0 : index
    %c0_23 = arith.constant 0 : index
    %73 = vector.load %arg5[%c0_22, %c0_23] : memref<2x256xf32, #tpu.memory_space<vmem>>, vector<2x256xf32>
    tpu.vector_store %arg5[%c0_22, %c0_23], %72 {strides = array<i32>} : memref<2x256xf32, #tpu.memory_space<vmem>>, vector<2x256xf32>,
    return
  }
  func.func @transform_0(%arg0: i32) -> (i32, i32) {
    %c0_i32 = arith.constant 0 : i32
    %c0_i32_0 = arith.constant 0 : i32
    return %c0_i32, %arg0 : i32, i32
  }
  func.func @transform_1(%arg0: i32) -> (i32, i32) {
    %c0_i32 = arith.constant 0 : i32
    %c0_i32_0 = arith.constant 0 : i32
    %c0_i32_1 = arith.constant 0 : i32
    return %c0_i32, %c0_i32_0 : i32, i32
  }
  func.func @transform_2(%arg0: i32) -> (i32, i32) {
    %c0_i32 = arith.constant 0 : i32
    %c0_i32_0 = arith.constant 0 : i32
    %c0_i32_1 = arith.constant 0 : i32
    return %c0_i32, %c0_i32_0 : i32, i32
  }
  func.func @transform_3(%arg0: i32) -> (i32, i32) {
    %c0_i32 = arith.constant 0 : i32
    %c0_i32_0 = arith.constant 0 : i32
    %c0_i32_1 = arith.constant 0 : i32
    return %c0_i32, %c0_i32_0 : i32, i32
  }
  func.func @transform_4(%arg0: i32) -> (i32, i32) {
    %c0_i32 = arith.constant 0 : i32
    %c0_i32_0 = arith.constant 0 : i32
    return %c0_i32, %arg0 : i32, i32
  }
}

</mosaic_0001>

<llo_original>
// kernel: tpu_custom_call.1
$region0: #{tpu_custom_call.1}
  #allocation0 [shape = 'u32[]', space=smem, size = 0x4, offset = 0x4, fixed_abs, tag = 'smem constant byte address 0x4 - core index']
  #allocation1 [shape = 'u32[144,128]{1,0:T(1,128)}', space=vmem, size = 0x12000, scoped, tag = 'internal scratch']
  %s0 = inlined_call_operand.vmem [shape: f32[2,256], index: 0, kind: input, shape index: {}]
  %s1 = inlined_call_operand.vmem [shape: f32[256,8], index: 1, kind: input, shape index: {}]
  %s2 = inlined_call_operand.hbm [shape: f32[256,256], index: 2, kind: input, shape index: {}]
  %s3 = inlined_call_operand.vmem [shape: f32[2,256], index: 3, kind: input, shape index: {}]
  %s4 = inlined_call_operand.hbm [shape: f32[2,256], index: 4, kind: output, shape index: {}]
  %s5 = sld [smem:[#allocation0]]
  $region30: #{tpu_custom_call.1} parent=0
    _
  %s7 = ssub.s32 1, %s5
  %s8 = scalar_select 0, %s7, %s5
  $region1: #{tpu_custom_call.1} parent=0
    #allocation2 [shape = 'u8[262144]{0}', space=vmem, size = 0x40000, scoped, tag = 'input window, operand 2, single buffered']
    #allocation3 [shape = 's32[1]{0}', space=sflag, size = 0x4, scoped, tag = 'scoped memory for tpu_custom_call.1']
    #allocation4 [shape = 's32[1]{0}', space=sflag, size = 0x4, scoped, tag = 'scoped memory for tpu_custom_call.1']
    #allocation5 [shape = 'u8[2048]{0}', space=vmem, size = 0x800, scoped, tag = 'output window, operand 0, single buffered']
    %9 = vsyncpa [#allocation3], 0
    %10 = vsyncpa [#allocation4], 0
    // Predicated region
    $region2: #{tpu_custom_call.1} parent=1 // pred_check
      _
    $region3: #{tpu_custom_call.1} parent=1 // pred_check_branch
      %12 = sbr.rel (0) target = $region5
    $region4: #{tpu_custom_call.1} parent=1 // pred_region
      _
    $region5: #{tpu_custom_call.1} parent=1 // pred_fallthru
      _
    // Predicated region
    $region6: #{tpu_custom_call.1} parent=1 // pred_check
      _
    $region7: #{tpu_custom_call.1} parent=1 // pred_check_branch
      %14 = sbr.rel (0) target = $region9
    $region8: #{tpu_custom_call.1} parent=1 // pred_region
      _
    $region9: #{tpu_custom_call.1} parent=1 // pred_fallthru
      _
    // Predicated region
    $region10: #{tpu_custom_call.1} parent=1 // pred_check
      _
    $region11: #{tpu_custom_call.1} parent=1 // pred_check_branch
      %16 = sbr.rel (0) target = $region13
    $region12: #{tpu_custom_call.1} parent=1 // pred_region
      %s18 = ssub.s32 8192, 8192
      %19 = vsyncadd [#allocation3], %s18
      %s20 = sshll.u32 [#allocation2], 4
      %s21 = int_to_ptr.vmem [resolvable:$true] %s20
      %26 = dma.hbm_to_vmem [thread:$0]  %s2, 8192, %s21, [#allocation3], 256, 256, 16
    $region13: #{tpu_custom_call.1} parent=1 // pred_fallthru
      _
    // Predicated region
    $region14: #{tpu_custom_call.1} parent=1 // pred_check
      _
    $region15: #{tpu_custom_call.1} parent=1 // pred_check_branch
      %28 = sbr.rel (0) target = $region17
    $region16: #{tpu_custom_call.1} parent=1 // pred_region
      _
    $region17: #{tpu_custom_call.1} parent=1 // pred_fallthru
      _
    // Predicated region
    $region18: #{tpu_custom_call.1} parent=1 // pred_check
      _
    $region19: #{tpu_custom_call.1} parent=1 // pred_check_branch
      %30 = sbr.rel (0) target = $region21
    $region20: #{tpu_custom_call.1} parent=1 // pred_region
      %31 = dma.done [#allocation3], 8192
    $region21: #{tpu_custom_call.1} parent=1 // pred_fallthru
      _
    %v32 = vld [vmem:[%s0] sm:$0xf]
    %v33 = vld [vmem:[%s1] sm:$0xff]
    %v34 = vld [vmem:[%s1 + $0x8] sm:$0xff]
    %v35 = vld [vmem:[%s1 + $0x10] sm:$0xff]
    %v36 = vld [vmem:[%s1 + $0x18] sm:$0xff]
    %v37 = vld [vmem:[%s1 + $0x20] sm:$0xff]
    %v38 = vld [vmem:[%s1 + $0x28] sm:$0xff]
    %v39 = vld [vmem:[%s1 + $0x30] sm:$0xff]
    %v40 = vld [vmem:[%s1 + $0x38] sm:$0xff]
    %v41 = vld [vmem:[%s1 + $0x40] sm:$0xff]
    %v42 = vld [vmem:[%s1 + $0x48] sm:$0xff]
    %v43 = vld [vmem:[%s1 + $0x50] sm:$0xff]
    %v44 = vld [vmem:[%s1 + $0x58] sm:$0xff]
    %v45 = vld [vmem:[%s1 + $0x60] sm:$0xff]
    %v46 = vld [vmem:[%s1 + $0x68] sm:$0xff]
    %v47 = vld [vmem:[%s1 + $0x70] sm:$0xff]
    %v48 = vld [vmem:[%s1 + $0x78] sm:$0xff]
    %v49 = vld [vmem:[%s1 + $0x80] sm:$0xff]
    %v50 = vld [vmem:[%s1 + $0x88] sm:$0xff]
    %v51 = vld [vmem:[%s1 + $0x90] sm:$0xff]
    %v52 = vld [vmem:[%s1 + $0x98] sm:$0xff]
    %v53 = vld [vmem:[%s1 + $0xa0] sm:$0xff]
    %v54 = vld [vmem:[%s1 + $0xa8] sm:$0xff]
    %v55 = vld [vmem:[%s1 + $0xb0] sm:$0xff]
    %v56 = vld [vmem:[%s1 + $0xb8] sm:$0xff]
    %v57 = vld [vmem:[%s1 + $0xc0] sm:$0xff]
    %v58 = vld [vmem:[%s1 + $0xc8] sm:$0xff]
    %v59 = vld [vmem:[%s1 + $0xd0] sm:$0xff]
    %v60 = vld [vmem:[%s1 + $0xd8] sm:$0xff]
    %v61 = vld [vmem:[%s1 + $0xe0] sm:$0xff]
    %v62 = vld [vmem:[%s1 + $0xe8] sm:$0xff]
    %v63 = vld [vmem:[%s1 + $0xf0] sm:$0xff]
    %v64 = vld [vmem:[%s1 + $0xf8] sm:$0xff]
    %66 = vset.pattern.permute.xlu0 0
    %67 = vperm.xlu0 %66, %v33
    %v68 = vpop.permute.xlu0 %67
    %71 = vset.pattern.permute.xlu0 0
    %72 = vperm.xlu0 %71, %v34
    %v73 = vpop.permute.xlu0 %72
    %76 = vset.pattern.permute.xlu0 0
    %77 = vperm.xlu0 %76, %v35
    %v78 = vpop.permute.xlu0 %77
    %81 = vset.pattern.permute.xlu0 0
    %82 = vperm.xlu0 %81, %v36
    %v83 = vpop.permute.xlu0 %82
    %86 = vset.pattern.permute.xlu0 0
    %87 = vperm.xlu0 %86, %v37
    %v88 = vpop.permute.xlu0 %87
    %91 = vset.pattern.permute.xlu0 0
    %92 = vperm.xlu0 %91, %v38
    %v93 = vpop.permute.xlu0 %92
    %96 = vset.pattern.permute.xlu0 0
    %97 = vperm.xlu0 %96, %v39
    %v98 = vpop.permute.xlu0 %97
    %101 = vset.pattern.permute.xlu0 0
    %102 = vperm.xlu0 %101, %v40
    %v103 = vpop.permute.xlu0 %102
    %106 = vset.pattern.permute.xlu0 0
    %107 = vperm.xlu0 %106, %v41
    %v108 = vpop.permute.xlu0 %107
    %111 = vset.pattern.permute.xlu0 0
    %112 = vperm.xlu0 %111, %v42
    %v113 = vpop.permute.xlu0 %112
    %116 = vset.pattern.permute.xlu0 0
    %117 = vperm.xlu0 %116, %v43
    %v118 = vpop.permute.xlu0 %117
    %121 = vset.pattern.permute.xlu0 0
    %122 = vperm.xlu0 %121, %v44
    %v123 = vpop.permute.xlu0 %122
    %126 = vset.pattern.permute.xlu0 0
    %127 = vperm.xlu0 %126, %v45
    %v128 = vpop.permute.xlu0 %127
    %131 = vset.pattern.permute.xlu0 0
    %132 = vperm.xlu0 %131, %v46
    %v133 = vpop.permute.xlu0 %132
    %136 = vset.pattern.permute.xlu0 0
    %137 = vperm.xlu0 %136, %v47
    %v138 = vpop.permute.xlu0 %137
    %141 = vset.pattern.permute.xlu0 0
    %142 = vperm.xlu0 %141, %v48
    %v143 = vpop.permute.xlu0 %142
    %146 = vset.pattern.permute.xlu0 0
    %147 = vperm.xlu0 %146, %v49
    %v148 = vpop.permute.xlu0 %147
    %151 = vset.pattern.permute.xlu0 0
    %152 = vperm.xlu0 %151, %v50
    %v153 = vpop.permute.xlu0 %152
    %156 = vset.pattern.permute.xlu0 0
    %157 = vperm.xlu0 %156, %v51
    %v158 = vpop.permute.xlu0 %157
    %161 = vset.pattern.permute.xlu0 0
    %162 = vperm.xlu0 %161, %v52
    %v163 = vpop.permute.xlu0 %162
    %166 = vset.pattern.permute.xlu0 0
    %167 = vperm.xlu0 %166, %v53
    %v168 = vpop.permute.xlu0 %167
    %171 = vset.pattern.permute.xlu0 0
    %172 = vperm.xlu0 %171, %v54
    %v173 = vpop.permute.xlu0 %172
    %176 = vset.pattern.permute.xlu0 0
    %177 = vperm.xlu0 %176, %v55
    %v178 = vpop.permute.xlu0 %177
    %181 = vset.pattern.permute.xlu0 0
    %182 = vperm.xlu0 %181, %v56
    %v183 = vpop.permute.xlu0 %182
    %186 = vset.pattern.permute.xlu0 0
    %187 = vperm.xlu0 %186, %v57
    %v188 = vpop.permute.xlu0 %187
    %191 = vset.pattern.permute.xlu0 0
    %192 = vperm.xlu0 %191, %v58
    %v193 = vpop.permute.xlu0 %192
    %196 = vset.pattern.permute.xlu0 0
    %197 = vperm.xlu0 %196, %v59
    %v198 = vpop.permute.xlu0 %197
    %201 = vset.pattern.permute.xlu0 0
    %202 = vperm.xlu0 %201, %v60
    %v203 = vpop.permute.xlu0 %202
    %206 = vset.pattern.permute.xlu0 0
    %207 = vperm.xlu0 %206, %v61
    %v208 = vpop.permute.xlu0 %207
    %211 = vset.pattern.permute.xlu0 0
    %212 = vperm.xlu0 %211, %v62
    %v213 = vpop.permute.xlu0 %212
    %216 = vset.pattern.permute.xlu0 0
    %217 = vperm.xlu0 %216, %v63
    %v218 = vpop.permute.xlu0 %217
    %221 = vset.pattern.permute.xlu0 0
    %222 = vperm.xlu0 %221, %v64
    %v223 = vpop.permute.xlu0 %222
    %v226 = vlaneseq
    %v227 = vshrl.u32 %v226, 7
    %v228 = vsub.s32 0, %v227
    %v229 = vrot.slane %v32, %v228
    %v230 = vlaneseq
    %v231 = vshrl.u32 %v230, 7
    %v232 = vsub.s32 2, %v231
    %v233 = vrot.slane %v32, %v232
    %v236 = vlaneseq
    %v237 = vshrl.u32 %v236, 7
    %v238 = vsub.s32 0, %v237
    %v239 = vrot.slane %v229, %v238
    %v240 = vlaneseq
    %v241 = vshrl.u32 %v240, 7
    %v242 = vsub.s32 0, %v241
    %v243 = vrot.slane %v233, %v242
    %v244 = vmul.f32 %v68, %v239
    %v245 = vmul.f32 %v68, %v243
    %v246 = vmul.f32 %v73, %v239
    %v247 = vmul.f32 %v73, %v243
    %v248 = vmul.f32 %v78, %v239
    %v249 = vmul.f32 %v78, %v243
    %v250 = vmul.f32 %v83, %v239
    %v251 = vmul.f32 %v83, %v243
    %v252 = vmul.f32 %v88, %v239
    %v253 = vmul.f32 %v88, %v243
    %v254 = vmul.f32 %v93, %v239
    %v255 = vmul.f32 %v93, %v243
    %v256 = vmul.f32 %v98, %v239
    %v257 = vmul.f32 %v98, %v243
    %v258 = vmul.f32 %v103, %v239
    %v259 = vmul.f32 %v103, %v243
    %v260 = vmul.f32 %v108, %v239
    %v261 = vmul.f32 %v108, %v243
    %v262 = vmul.f32 %v113, %v239
    %v263 = vmul.f32 %v113, %v243
    %v264 = vmul.f32 %v118, %v239
    %v265 = vmul.f32 %v118, %v243
    %v266 = vmul.f32 %v123, %v239
    %v267 = vmul.f32 %v123, %v243
    %v268 = vmul.f32 %v128, %v239
    %v269 = vmul.f32 %v128, %v243
    %v270 = vmul.f32 %v133, %v239
    %v271 = vmul.f32 %v133, %v243
    %v272 = vmul.f32 %v138, %v239
    %v273 = vmul.f32 %v138, %v243
    %v274 = vmul.f32 %v143, %v239
    %v275 = vmul.f32 %v143, %v243
    %v276 = vmul.f32 %v148, %v239
    %v277 = vmul.f32 %v148, %v243
    %v278 = vmul.f32 %v153, %v239
    %v279 = vmul.f32 %v153, %v243
    %v280 = vmul.f32 %v158, %v239
    %v281 = vmul.f32 %v158, %v243
    %v282 = vmul.f32 %v163, %v239
    %v283 = vmul.f32 %v163, %v243
    %v284 = vmul.f32 %v168, %v239
    %v285 = vmul.f32 %v168, %v243
    %v286 = vmul.f32 %v173, %v239
    %v287 = vmul.f32 %v173, %v243
    %v288 = vmul.f32 %v178, %v239
    %v289 = vmul.f32 %v178, %v243
    %v290 = vmul.f32 %v183, %v239
    %v291 = vmul.f32 %v183, %v243
    %v292 = vmul.f32 %v188, %v239
    %v293 = vmul.f32 %v188, %v243
    %v294 = vmul.f32 %v193, %v239
    %v295 = vmul.f32 %v193, %v243
    %v296 = vmul.f32 %v198, %v239
    %v297 = vmul.f32 %v198, %v243
    %v298 = vmul.f32 %v203, %v239
    %v299 = vmul.f32 %v203, %v243
    %v300 = vmul.f32 %v208, %v239
    %v301 = vmul.f32 %v208, %v243
    %v302 = vmul.f32 %v213, %v239
    %v303 = vmul.f32 %v213, %v243
    %v304 = vmul.f32 %v218, %v239
    %v305 = vmul.f32 %v218, %v243
    %v306 = vmul.f32 %v223, %v239
    %v307 = vmul.f32 %v223, %v243
    %308 = vset.pattern.permute.xlu0 1
    %309 = vperm.xlu0 %308, %v33
    %v310 = vpop.permute.xlu0 %309
    %312 = vset.pattern.permute.xlu0 1
    %313 = vperm.xlu0 %312, %v34
    %v314 = vpop.permute.xlu0 %313
    %316 = vset.pattern.permute.xlu0 1
    %317 = vperm.xlu0 %316, %v35
    %v318 = vpop.permute.xlu0 %317
    %320 = vset.pattern.permute.xlu0 1
    %321 = vperm.xlu0 %320, %v36
    %v322 = vpop.permute.xlu0 %321
    %324 = vset.pattern.permute.xlu0 1
    %325 = vperm.xlu0 %324, %v37
    %v326 = vpop.permute.xlu0 %325
    %328 = vset.pattern.permute.xlu0 1
    %329 = vperm.xlu0 %328, %v38
    %v330 = vpop.permute.xlu0 %329
    %332 = vset.pattern.permute.xlu0 1
    %333 = vperm.xlu0 %332, %v39
    %v334 = vpop.permute.xlu0 %333
    %336 = vset.pattern.permute.xlu0 1
    %337 = vperm.xlu0 %336, %v40
    %v338 = vpop.permute.xlu0 %337
    %340 = vset.pattern.permute.xlu0 1
    %341 = vperm.xlu0 %340, %v41
    %v342 = vpop.permute.xlu0 %341
    %344 = vset.pattern.permute.xlu0 1
    %345 = vperm.xlu0 %344, %v42
    %v346 = vpop.permute.xlu0 %345
    %348 = vset.pattern.permute.xlu0 1
    %349 = vperm.xlu0 %348, %v43
    %v350 = vpop.permute.xlu0 %349
    %352 = vset.pattern.permute.xlu0 1
    %353 = vperm.xlu0 %352, %v44
    %v354 = vpop.permute.xlu0 %353
    %356 = vset.pattern.permute.xlu0 1
    %357 = vperm.xlu0 %356, %v45
    %v358 = vpop.permute.xlu0 %357
    %360 = vset.pattern.permute.xlu0 1
    %361 = vperm.xlu0 %360, %v46
    %v362 = vpop.permute.xlu0 %361
    %364 = vset.pattern.permute.xlu0 1
    %365 = vperm.xlu0 %364, %v47
    %v366 = vpop.permute.xlu0 %365
    %368 = vset.pattern.permute.xlu0 1
    %369 = vperm.xlu0 %368, %v48
    %v370 = vpop.permute.xlu0 %369
    %372 = vset.pattern.permute.xlu0 1
    %373 = vperm.xlu0 %372, %v49
    %v374 = vpop.permute.xlu0 %373
    %376 = vset.pattern.permute.xlu0 1
    %377 = vperm.xlu0 %376, %v50
    %v378 = vpop.permute.xlu0 %377
    %380 = vset.pattern.permute.xlu0 1
    %381 = vperm.xlu0 %380, %v51
    %v382 = vpop.permute.xlu0 %381
    %384 = vset.pattern.permute.xlu0 1
    %385 = vperm.xlu0 %384, %v52
    %v386 = vpop.permute.xlu0 %385
    %388 = vset.pattern.permute.xlu0 1
    %389 = vperm.xlu0 %388, %v53
    %v390 = vpop.permute.xlu0 %389
    %392 = vset.pattern.permute.xlu0 1
    %393 = vperm.xlu0 %392, %v54
    %v394 = vpop.permute.xlu0 %393
    %396 = vset.pattern.permute.xlu0 1
    %397 = vperm.xlu0 %396, %v55
    %v398 = vpop.permute.xlu0 %397
    %400 = vset.pattern.permute.xlu0 1
    %401 = vperm.xlu0 %400, %v56
    %v402 = vpop.permute.xlu0 %401
    %404 = vset.pattern.permute.xlu0 1
    %405 = vperm.xlu0 %404, %v57
    %v406 = vpop.permute.xlu0 %405
    %408 = vset.pattern.permute.xlu0 1
    %409 = vperm.xlu0 %408, %v58
    %v410 = vpop.permute.xlu0 %409
    %412 = vset.pattern.permute.xlu0 1
    %413 = vperm.xlu0 %412, %v59
    %v414 = vpop.permute.xlu0 %413
    %416 = vset.pattern.permute.xlu0 1
    %417 = vperm.xlu0 %416, %v60
    %v418 = vpop.permute.xlu0 %417
    %420 = vset.pattern.permute.xlu0 1
    %421 = vperm.xlu0 %420, %v61
    %v422 = vpop.permute.xlu0 %421
    %424 = vset.pattern.permute.xlu0 1
    %425 = vperm.xlu0 %424, %v62
    %v426 = vpop.permute.xlu0 %425
    %428 = vset.pattern.permute.xlu0 1
    %429 = vperm.xlu0 %428, %v63
    %v430 = vpop.permute.xlu0 %429
    %432 = vset.pattern.permute.xlu0 1
    %433 = vperm.xlu0 %432, %v64
    %v434 = vpop.permute.xlu0 %433
    %v436 = vlaneseq
    %v437 = vshrl.u32 %v436, 7
    %v438 = vsub.s32 1, %v437
    %v439 = vrot.slane %v32, %v438
    %v440 = vlaneseq
    %v441 = vshrl.u32 %v440, 7
    %v442 = vsub.s32 3, %v441
    %v443 = vrot.slane %v32, %v442
    %v446 = vlaneseq
    %v447 = vshrl.u32 %v446, 7
    %v448 = vsub.s32 1, %v447
    %v449 = vrot.slane %v439, %v448
    %v450 = vlaneseq
    %v451 = vshrl.u32 %v450, 7
    %v452 = vsub.s32 1, %v451
    %v453 = vrot.slane %v443, %v452
    %v454 = vmul.f32 %v310, %v449
    %v455 = vmul.f32 %v310, %v453
    %v456 = vmul.f32 %v314, %v449
    %v457 = vmul.f32 %v314, %v453
    %v458 = vmul.f32 %v318, %v449
    %v459 = vmul.f32 %v318, %v453
    %v460 = vmul.f32 %v322, %v449
    %v461 = vmul.f32 %v322, %v453
    %v462 = vmul.f32 %v326, %v449
    %v463 = vmul.f32 %v326, %v453
    %v464 = vmul.f32 %v330, %v449
    %v465 = vmul.f32 %v330, %v453
    %v466 = vmul.f32 %v334, %v449
    %v467 = vmul.f32 %v334, %v453
    %v468 = vmul.f32 %v338, %v449
    %v469 = vmul.f32 %v338, %v453
    %v470 = vmul.f32 %v342, %v449
    %v471 = vmul.f32 %v342, %v453
    %v472 = vmul.f32 %v346, %v449
    %v473 = vmul.f32 %v346, %v453
    %v474 = vmul.f32 %v350, %v449
    %v475 = vmul.f32 %v350, %v453
    %v476 = vmul.f32 %v354, %v449
    %v477 = vmul.f32 %v354, %v453
    %v478 = vmul.f32 %v358, %v449
    %v479 = vmul.f32 %v358, %v453
    %v480 = vmul.f32 %v362, %v449
    %v481 = vmul.f32 %v362, %v453
    %v482 = vmul.f32 %v366, %v449
    %v483 = vmul.f32 %v366, %v453
    %v484 = vmul.f32 %v370, %v449
    %v485 = vmul.f32 %v370, %v453
    %v486 = vmul.f32 %v374, %v449
    %v487 = vmul.f32 %v374, %v453
    %v488 = vmul.f32 %v378, %v449
    %v489 = vmul.f32 %v378, %v453
    %v490 = vmul.f32 %v382, %v449
    %v491 = vmul.f32 %v382, %v453
    %v492 = vmul.f32 %v386, %v449
    %v493 = vmul.f32 %v386, %v453
    %v494 = vmul.f32 %v390, %v449
    %v495 = vmul.f32 %v390, %v453
    %v496 = vmul.f32 %v394, %v449
    %v497 = vmul.f32 %v394, %v453
    %v498 = vmul.f32 %v398, %v449
    %v499 = vmul.f32 %v398, %v453
    %v500 = vmul.f32 %v402, %v449
    %v501 = vmul.f32 %v402, %v453
    %v502 = vmul.f32 %v406, %v449
    %v503 = vmul.f32 %v406, %v453
    %v504 = vmul.f32 %v410, %v449
    %v505 = vmul.f32 %v410, %v453
    %v506 = vmul.f32 %v414, %v449
    %v507 = vmul.f32 %v414, %v453
    %v508 = vmul.f32 %v418, %v449
    %v509 = vmul.f32 %v418, %v453
    %v510 = vmul.f32 %v422, %v449
    %v511 = vmul.f32 %v422, %v453
    %v512 = vmul.f32 %v426, %v449
    %v513 = vmul.f32 %v426, %v453
    %v514 = vmul.f32 %v430, %v449
    %v515 = vmul.f32 %v430, %v453
    %v516 = vmul.f32 %v434, %v449
    %v517 = vmul.f32 %v434, %v453
    %v518 = vadd.f32 %v244, %v454
    %v519 = vadd.f32 %v245, %v455
    %v520 = vadd.f32 %v246, %v456
    %v521 = vadd.f32 %v247, %v457
    %v522 = vadd.f32 %v248, %v458
    %v523 = vadd.f32 %v249, %v459
    %v524 = vadd.f32 %v250, %v460
    %v525 = vadd.f32 %v251, %v461
    %v526 = vadd.f32 %v252, %v462
    %v527 = vadd.f32 %v253, %v463
    %v528 = vadd.f32 %v254, %v464
    %v529 = vadd.f32 %v255, %v465
    %v530 = vadd.f32 %v256, %v466
    %v531 = vadd.f32 %v257, %v467
    %v532 = vadd.f32 %v258, %v468
    %v533 = vadd.f32 %v259, %v469
    %v534 = vadd.f32 %v260, %v470
    %v535 = vadd.f32 %v261, %v471
    %v536 = vadd.f32 %v262, %v472
    %v537 = vadd.f32 %v263, %v473
    %v538 = vadd.f32 %v264, %v474
    %v539 = vadd.f32 %v265, %v475
    %v540 = vadd.f32 %v266, %v476
    %v541 = vadd.f32 %v267, %v477
    %v542 = vadd.f32 %v268, %v478
    %v543 = vadd.f32 %v269, %v479
    %v544 = vadd.f32 %v270, %v480
    %v545 = vadd.f32 %v271, %v481
    %v546 = vadd.f32 %v272, %v482
    %v547 = vadd.f32 %v273, %v483
    %v548 = vadd.f32 %v274, %v484
    %v549 = vadd.f32 %v275, %v485
    %v550 = vadd.f32 %v276, %v486
    %v551 = vadd.f32 %v277, %v487
    %v552 = vadd.f32 %v278, %v488
    %v553 = vadd.f32 %v279, %v489
    %v554 = vadd.f32 %v280, %v490
    %v555 = vadd.f32 %v281, %v491
    %v556 = vadd.f32 %v282, %v492
    %v557 = vadd.f32 %v283, %v493
    %v558 = vadd.f32 %v284, %v494
    %v559 = vadd.f32 %v285, %v495
    %v560 = vadd.f32 %v286, %v496
    %v561 = vadd.f32 %v287, %v497
    %v562 = vadd.f32 %v288, %v498
    %v563 = vadd.f32 %v289, %v499
    %v564 = vadd.f32 %v290, %v500
    %v565 = vadd.f32 %v291, %v501
    %v566 = vadd.f32 %v292, %v502
    %v567 = vadd.f32 %v293, %v503
    %v568 = vadd.f32 %v294, %v504
    %v569 = vadd.f32 %v295, %v505
    %v570 = vadd.f32 %v296, %v506
    %v571 = vadd.f32 %v297, %v507
    %v572 = vadd.f32 %v298, %v508
    %v573 = vadd.f32 %v299, %v509
    %v574 = vadd.f32 %v300, %v510
    %v575 = vadd.f32 %v301, %v511
    %v576 = vadd.f32 %v302, %v512
    %v577 = vadd.f32 %v303, %v513
    %v578 = vadd.f32 %v304, %v514
    %v579 = vadd.f32 %v305, %v515
    %v580 = vadd.f32 %v306, %v516
    %v581 = vadd.f32 %v307, %v517
    %582 = vset.pattern.permute.xlu0 2
    %583 = vperm.xlu0 %582, %v33
    %v584 = vpop.permute.xlu0 %583
    %586 = vset.pattern.permute.xlu0 2
    %587 = vperm.xlu0 %586, %v34
    %v588 = vpop.permute.xlu0 %587
    %590 = vset.pattern.permute.xlu0 2
    %591 = vperm.xlu0 %590, %v35
    %v592 = vpop.permute.xlu0 %591
    %594 = vset.pattern.permute.xlu0 2
    %595 = vperm.xlu0 %594, %v36
    %v596 = vpop.permute.xlu0 %595
    %598 = vset.pattern.permute.xlu0 2
    %599 = vperm.xlu0 %598, %v37
    %v600 = vpop.permute.xlu0 %599
    %602 = vset.pattern.permute.xlu0 2
    %603 = vperm.xlu0 %602, %v38
    %v604 = vpop.permute.xlu0 %603
    %606 = vset.pattern.permute.xlu0 2
    %607 = vperm.xlu0 %606, %v39
    %v608 = vpop.permute.xlu0 %607
    %610 = vset.pattern.permute.xlu0 2
    %611 = vperm.xlu0 %610, %v40
    %v612 = vpop.permute.xlu0 %611
    %614 = vset.pattern.permute.xlu0 2
    %615 = vperm.xlu0 %614, %v41
    %v616 = vpop.permute.xlu0 %615
    %618 = vset.pattern.permute.xlu0 2
    %619 = vperm.xlu0 %618, %v42
    %v620 = vpop.permute.xlu0 %619
    %622 = vset.pattern.permute.xlu0 2
    %623 = vperm.xlu0 %622, %v43
    %v624 = vpop.permute.xlu0 %623
    %626 = vset.pattern.permute.xlu0 2
    %627 = vperm.xlu0 %626, %v44
    %v628 = vpop.permute.xlu0 %627
    %630 = vset.pattern.permute.xlu0 2
    %631 = vperm.xlu0 %630, %v45
    %v632 = vpop.permute.xlu0 %631
    %634 = vset.pattern.permute.xlu0 2
    %635 = vperm.xlu0 %634, %v46
    %v636 = vpop.permute.xlu0 %635
    %638 = vset.pattern.permute.xlu0 2
    %639 = vperm.xlu0 %638, %v47
    %v640 = vpop.permute.xlu0 %639
    %642 = vset.pattern.permute.xlu0 2
    %643 = vperm.xlu0 %642, %v48
    %v644 = vpop.permute.xlu0 %643
    %646 = vset.pattern.permute.xlu0 2
    %647 = vperm.xlu0 %646, %v49
    %v648 = vpop.permute.xlu0 %647
    %650 = vset.pattern.permute.xlu0 2
    %651 = vperm.xlu0 %650, %v50
    %v652 = vpop.permute.xlu0 %651
    %654 = vset.pattern.permute.xlu0 2
    %655 = vperm.xlu0 %654, %v51
    %v656 = vpop.permute.xlu0 %655
    %658 = vset.pattern.permute.xlu0 2
    %659 = vperm.xlu0 %658, %v52
    %v660 = vpop.permute.xlu0 %659
    %662 = vset.pattern.permute.xlu0 2
    %663 = vperm.xlu0 %662, %v53
    %v664 = vpop.permute.xlu0 %663
    %666 = vset.pattern.permute.xlu0 2
    %667 = vperm.xlu0 %666, %v54
    %v668 = vpop.permute.xlu0 %667
    %670 = vset.pattern.permute.xlu0 2
    %671 = vperm.xlu0 %670, %v55
    %v672 = vpop.permute.xlu0 %671
    %674 = vset.pattern.permute.xlu0 2
    %675 = vperm.xlu0 %674, %v56
    %v676 = vpop.permute.xlu0 %675
    %678 = vset.pattern.permute.xlu0 2
    %679 = vperm.xlu0 %678, %v57
    %v680 = vpop.permute.xlu0 %679
    %682 = vset.pattern.permute.xlu0 2
    %683 = vperm.xlu0 %682, %v58
    %v684 = vpop.permute.xlu0 %683
    %686 = vset.pattern.permute.xlu0 2
    %687 = vperm.xlu0 %686, %v59
    %v688 = vpop.permute.xlu0 %687
    %690 = vset.pattern.permute.xlu0 2
    %691 = vperm.xlu0 %690, %v60
    %v692 = vpop.permute.xlu0 %691
    %694 = vset.pattern.permute.xlu0 2
    %695 = vperm.xlu0 %694, %v61
    %v696 = vpop.permute.xlu0 %695
    %698 = vset.pattern.permute.xlu0 2
    %699 = vperm.xlu0 %698, %v62
    %v700 = vpop.permute.xlu0 %699
    %702 = vset.pattern.permute.xlu0 2
    %703 = vperm.xlu0 %702, %v63
    %v704 = vpop.permute.xlu0 %703
    %706 = vset.pattern.permute.xlu0 2
    %707 = vperm.xlu0 %706, %v64
    %v708 = vpop.permute.xlu0 %707
    %v710 = vadd.f32 %v518, %v584
    %v711 = vadd.f32 %v519, %v584
    %v712 = vadd.f32 %v520, %v588
    %v713 = vadd.f32 %v521, %v588
    %v714 = vadd.f32 %v522, %v592
    %v715 = vadd.f32 %v523, %v592
    %v716 = vadd.f32 %v524, %v596
    %v717 = vadd.f32 %v525, %v596
    %v718 = vadd.f32 %v526, %v600
    %v719 = vadd.f32 %v527, %v600
    %v720 = vadd.f32 %v528, %v604
    %v721 = vadd.f32 %v529, %v604
    %v722 = vadd.f32 %v530, %v608
    %v723 = vadd.f32 %v531, %v608
    %v724 = vadd.f32 %v532, %v612
    %v725 = vadd.f32 %v533, %v612
    %v726 = vadd.f32 %v534, %v616
    %v727 = vadd.f32 %v535, %v616
    %v728 = vadd.f32 %v536, %v620
    %v729 = vadd.f32 %v537, %v620
    %v730 = vadd.f32 %v538, %v624
    %v731 = vadd.f32 %v539, %v624
    %v732 = vadd.f32 %v540, %v628
    %v733 = vadd.f32 %v541, %v628
    %v734 = vadd.f32 %v542, %v632
    %v735 = vadd.f32 %v543, %v632
    %v736 = vadd.f32 %v544, %v636
    %v737 = vadd.f32 %v545, %v636
    %v738 = vadd.f32 %v546, %v640
    %v739 = vadd.f32 %v547, %v640
    %v740 = vadd.f32 %v548, %v644
    %v741 = vadd.f32 %v549, %v644
    %v742 = vadd.f32 %v550, %v648
    %v743 = vadd.f32 %v551, %v648
    %v744 = vadd.f32 %v552, %v652
    %v745 = vadd.f32 %v553, %v652
    %v746 = vadd.f32 %v554, %v656
    %v747 = vadd.f32 %v555, %v656
    %v748 = vadd.f32 %v556, %v660
    %v749 = vadd.f32 %v557, %v660
    %v750 = vadd.f32 %v558, %v664
    %v751 = vadd.f32 %v559, %v664
    %v752 = vadd.f32 %v560, %v668
    %v753 = vadd.f32 %v561, %v668
    %v754 = vadd.f32 %v562, %v672
    %v755 = vadd.f32 %v563, %v672
    %v756 = vadd.f32 %v564, %v676
    %v757 = vadd.f32 %v565, %v676
    %v758 = vadd.f32 %v566, %v680
    %v759 = vadd.f32 %v567, %v680
    %v760 = vadd.f32 %v568, %v684
    %v761 = vadd.f32 %v569, %v684
    %v762 = vadd.f32 %v570, %v688
    %v763 = vadd.f32 %v571, %v688
    %v764 = vadd.f32 %v572, %v692
    %v765 = vadd.f32 %v573, %v692
    %v766 = vadd.f32 %v574, %v696
    %v767 = vadd.f32 %v575, %v696
    %v768 = vadd.f32 %v576, %v700
    %v769 = vadd.f32 %v577, %v700
    %v770 = vadd.f32 %v578, %v704
    %v771 = vadd.f32 %v579, %v704
    %v772 = vadd.f32 %v580, %v708
    %v773 = vadd.f32 %v581, %v708
    %v774 = vmax.f32 %v710, 0.0
    %v775 = vmax.f32 %v711, 0.0
    %v776 = vmax.f32 %v712, 0.0
    %v777 = vmax.f32 %v713, 0.0
    %v778 = vmax.f32 %v714, 0.0
    %v779 = vmax.f32 %v715, 0.0
    %v780 = vmax.f32 %v716, 0.0
    %v781 = vmax.f32 %v717, 0.0
    %v782 = vmax.f32 %v718, 0.0
    %v783 = vmax.f32 %v719, 0.0
    %v784 = vmax.f32 %v720, 0.0
    %v785 = vmax.f32 %v721, 0.0
    %v786 = vmax.f32 %v722, 0.0
    %v787 = vmax.f32 %v723, 0.0
    %v788 = vmax.f32 %v724, 0.0
    %v789 = vmax.f32 %v725, 0.0
    %v790 = vmax.f32 %v726, 0.0
    %v791 = vmax.f32 %v727, 0.0
    %v792 = vmax.f32 %v728, 0.0
    %v793 = vmax.f32 %v729, 0.0
    %v794 = vmax.f32 %v730, 0.0
    %v795 = vmax.f32 %v731, 0.0
    %v796 = vmax.f32 %v732, 0.0
    %v797 = vmax.f32 %v733, 0.0
    %v798 = vmax.f32 %v734, 0.0
    %v799 = vmax.f32 %v735, 0.0
    %v800 = vmax.f32 %v736, 0.0
    %v801 = vmax.f32 %v737, 0.0
    %v802 = vmax.f32 %v738, 0.0
    %v803 = vmax.f32 %v739, 0.0
    %v804 = vmax.f32 %v740, 0.0
    %v805 = vmax.f32 %v741, 0.0
    %v806 = vmax.f32 %v742, 0.0
    %v807 = vmax.f32 %v743, 0.0
    %v808 = vmax.f32 %v744, 0.0
    %v809 = vmax.f32 %v745, 0.0
    %v810 = vmax.f32 %v746, 0.0
    %v811 = vmax.f32 %v747, 0.0
    %v812 = vmax.f32 %v748, 0.0
    %v813 = vmax.f32 %v749, 0.0
    %v814 = vmax.f32 %v750, 0.0
    %v815 = vmax.f32 %v751, 0.0
    %v816 = vmax.f32 %v752, 0.0
    %v817 = vmax.f32 %v753, 0.0
    %v818 = vmax.f32 %v754, 0.0
    %v819 = vmax.f32 %v755, 0.0
    %v820 = vmax.f32 %v756, 0.0
    %v821 = vmax.f32 %v757, 0.0
    %v822 = vmax.f32 %v758, 0.0
    %v823 = vmax.f32 %v759, 0.0
    %v824 = vmax.f32 %v760, 0.0
    %v825 = vmax.f32 %v761, 0.0
    %v826 = vmax.f32 %v762, 0.0
    %v827 = vmax.f32 %v763, 0.0
    %v828 = vmax.f32 %v764, 0.0
    %v829 = vmax.f32 %v765, 0.0
    %v830 = vmax.f32 %v766, 0.0
    %v831 = vmax.f32 %v767, 0.0
    %v832 = vmax.f32 %v768, 0.0
    %v833 = vmax.f32 %v769, 0.0
    %v834 = vmax.f32 %v770, 0.0
    %v835 = vmax.f32 %v771, 0.0
    %v836 = vmax.f32 %v772, 0.0
    %v837 = vmax.f32 %v773, 0.0
    %v838 = vadd.f32 %v774, %v776
    %v839 = vadd.f32 %v838, %v778
    %v840 = vadd.f32 %v839, %v780
    %v841 = vadd.f32 %v840, %v782
    %v842 = vadd.f32 %v841, %v784
    %v843 = vadd.f32 %v842, %v786
    %v844 = vadd.f32 %v843, %v788
    %v845 = vadd.f32 %v844, %v790
    %v846 = vadd.f32 %v845, %v792
    %v847 = vadd.f32 %v846, %v794
    %v848 = vadd.f32 %v847, %v796
    %v849 = vadd.f32 %v848, %v798
    %v850 = vadd.f32 %v849, %v800
    %v851 = vadd.f32 %v850, %v802
    %v852 = vadd.f32 %v851, %v804
    %v853 = vadd.f32 %v852, %v806
    %v854 = vadd.f32 %v853, %v808
    %v855 = vadd.f32 %v854, %v810
    %v856 = vadd.f32 %v855, %v812
    %v857 = vadd.f32 %v856, %v814
    %v858 = vadd.f32 %v857, %v816
    %v859 = vadd.f32 %v858, %v818
    %v860 = vadd.f32 %v859, %v820
    %v861 = vadd.f32 %v860, %v822
    %v862 = vadd.f32 %v861, %v824
    %v863 = vadd.f32 %v862, %v826
    %v864 = vadd.f32 %v863, %v828
    %v865 = vadd.f32 %v864, %v830
    %v866 = vadd.f32 %v865, %v832
    %v867 = vadd.f32 %v866, %v834
    %v868 = vadd.f32 %v867, %v836
    %v869 = vrot.slane %v868, 4
    %v870 = vadd.f32 %v868, %v869
    %v871 = vrot.slane %v870, 2
    %v872 = vadd.f32 %v870, %v871
    %v873 = vrot.slane %v872, 1
    %v874 = vadd.f32 %v872, %v873
    %v875 = vadd.f32 %v775, %v777
    %v876 = vadd.f32 %v875, %v779
    %v877 = vadd.f32 %v876, %v781
    %v878 = vadd.f32 %v877, %v783
    %v879 = vadd.f32 %v878, %v785
    %v880 = vadd.f32 %v879, %v787
    %v881 = vadd.f32 %v880, %v789
    %v882 = vadd.f32 %v881, %v791
    %v883 = vadd.f32 %v882, %v793
    %v884 = vadd.f32 %v883, %v795
    %v885 = vadd.f32 %v884, %v797
    %v886 = vadd.f32 %v885, %v799
    %v887 = vadd.f32 %v886, %v801
    %v888 = vadd.f32 %v887, %v803
    %v889 = vadd.f32 %v888, %v805
    %v890 = vadd.f32 %v889, %v807
    %v891 = vadd.f32 %v890, %v809
    %v892 = vadd.f32 %v891, %v811
    %v893 = vadd.f32 %v892, %v813
    %v894 = vadd.f32 %v893, %v815
    %v895 = vadd.f32 %v894, %v817
    %v896 = vadd.f32 %v895, %v819
    %v897 = vadd.f32 %v896, %v821
    %v898 = vadd.f32 %v897, %v823
    %v899 = vadd.f32 %v898, %v825
    %v900 = vadd.f32 %v899, %v827
    %v901 = vadd.f32 %v900, %v829
    %v902 = vadd.f32 %v901, %v831
    %v903 = vadd.f32 %v902, %v833
    %v904 = vadd.f32 %v903, %v835
    %v905 = vadd.f32 %v904, %v837
    %v906 = vrot.slane %v905, 4
    %v907 = vadd.f32 %v905, %v906
    %v908 = vrot.slane %v907, 2
    %v909 = vadd.f32 %v907, %v908
    %v910 = vrot.slane %v909, 1
    %v911 = vadd.f32 %v909, %v910
    %v912 = vrcp.pop 256.0
    %v913 = vmul.f32 %v874, %v912
    %v914 = vmul.f32 %v911, %v912
    %v915 = vmul.f32 %v774, %v774
    %v916 = vmul.f32 %v775, %v775
    %v917 = vmul.f32 %v776, %v776
    %v918 = vmul.f32 %v777, %v777
    %v919 = vmul.f32 %v778, %v778
    %v920 = vmul.f32 %v779, %v779
    %v921 = vmul.f32 %v780, %v780
    %v922 = vmul.f32 %v781, %v781
    %v923 = vmul.f32 %v782, %v782
    %v924 = vmul.f32 %v783, %v783
    %v925 = vmul.f32 %v784, %v784
    %v926 = vmul.f32 %v785, %v785
    %v927 = vmul.f32 %v786, %v786
    %v928 = vmul.f32 %v787, %v787
    %v929 = vmul.f32 %v788, %v788
    %v930 = vmul.f32 %v789, %v789
    %v931 = vmul.f32 %v790, %v790
    %v932 = vmul.f32 %v791, %v791
    %v933 = vmul.f32 %v792, %v792
    %v934 = vmul.f32 %v793, %v793
    %v935 = vmul.f32 %v794, %v794
    %v936 = vmul.f32 %v795, %v795
    %v937 = vmul.f32 %v796, %v796
    %v938 = vmul.f32 %v797, %v797
    %v939 = vmul.f32 %v798, %v798
    %v940 = vmul.f32 %v799, %v799
    %v941 = vmul.f32 %v800, %v800
    %v942 = vmul.f32 %v801, %v801
    %v943 = vmul.f32 %v802, %v802
    %v944 = vmul.f32 %v803, %v803
    %v945 = vmul.f32 %v804, %v804
    %v946 = vmul.f32 %v805, %v805
    %v947 = vmul.f32 %v806, %v806
    %v948 = vmul.f32 %v807, %v807
    %v949 = vmul.f32 %v808, %v808
    %v950 = vmul.f32 %v809, %v809
    %v951 = vmul.f32 %v810, %v810
    %v952 = vmul.f32 %v811, %v811
    %v953 = vmul.f32 %v812, %v812
    %v954 = vmul.f32 %v813, %v813
    %v955 = vmul.f32 %v814, %v814
    %v956 = vmul.f32 %v815, %v815
    %v957 = vmul.f32 %v816, %v816
    %v958 = vmul.f32 %v817, %v817
    %v959 = vmul.f32 %v818, %v818
    %v960 = vmul.f32 %v819, %v819
    %v961 = vmul.f32 %v820, %v820
    %v962 = vmul.f32 %v821, %v821
    %v963 = vmul.f32 %v822, %v822
    %v964 = vmul.f32 %v823, %v823
    %v965 = vmul.f32 %v824, %v824
    %v966 = vmul.f32 %v825, %v825
    %v967 = vmul.f32 %v826, %v826
    %v968 = vmul.f32 %v827, %v827
    %v969 = vmul.f32 %v828, %v828
    %v970 = vmul.f32 %v829, %v829
    %v971 = vmul.f32 %v830, %v830
    %v972 = vmul.f32 %v831, %v831
    %v973 = vmul.f32 %v832, %v832
    %v974 = vmul.f32 %v833, %v833
    %v975 = vmul.f32 %v834, %v834
    %v976 = vmul.f32 %v835, %v835
    %v977 = vmul.f32 %v836, %v836
    %v978 = vmul.f32 %v837, %v837
    %v979 = vadd.f32 %v915, %v917
    %v980 = vadd.f32 %v979, %v919
    %v981 = vadd.f32 %v980, %v921
    %v982 = vadd.f32 %v981, %v923
    %v983 = vadd.f32 %v982, %v925
    %v984 = vadd.f32 %v983, %v927
    %v985 = vadd.f32 %v984, %v929
    %v986 = vadd.f32 %v985, %v931
    %v987 = vadd.f32 %v986, %v933
    %v988 = vadd.f32 %v987, %v935
    %v989 = vadd.f32 %v988, %v937
    %v990 = vadd.f32 %v989, %v939
    %v991 = vadd.f32 %v990, %v941
    %v992 = vadd.f32 %v991, %v943
    %v993 = vadd.f32 %v992, %v945
    %v994 = vadd.f32 %v993, %v947
    %v995 = vadd.f32 %v994, %v949
    %v996 = vadd.f32 %v995, %v951
    %v997 = vadd.f32 %v996, %v953
    %v998 = vadd.f32 %v997, %v955
    %v999 = vadd.f32 %v998, %v957
    %v1000 = vadd.f32 %v999, %v959
    %v1001 = vadd.f32 %v1000, %v961
    %v1002 = vadd.f32 %v1001, %v963
    %v1003 = vadd.f32 %v1002, %v965
    %v1004 = vadd.f32 %v1003, %v967
    %v1005 = vadd.f32 %v1004, %v969
    %v1006 = vadd.f32 %v1005, %v971
    %v1007 = vadd.f32 %v1006, %v973
    %v1008 = vadd.f32 %v1007, %v975
    %v1009 = vadd.f32 %v1008, %v977
    %v1010 = vrot.slane %v1009, 4
    %v1011 = vadd.f32 %v1009, %v1010
    %v1012 = vrot.slane %v1011, 2
    %v1013 = vadd.f32 %v1011, %v1012
    %v1014 = vrot.slane %v1013, 1
    %v1015 = vadd.f32 %v1013, %v1014
    %v1016 = vadd.f32 %v916, %v918
    %v1017 = vadd.f32 %v1016, %v920
    %v1018 = vadd.f32 %v1017, %v922
    %v1019 = vadd.f32 %v1018, %v924
    %v1020 = vadd.f32 %v1019, %v926
    %v1021 = vadd.f32 %v1020, %v928
    %v1022 = vadd.f32 %v1021, %v930
    %v1023 = vadd.f32 %v1022, %v932
    %v1024 = vadd.f32 %v1023, %v934
    %v1025 = vadd.f32 %v1024, %v936
    %v1026 = vadd.f32 %v1025, %v938
    %v1027 = vadd.f32 %v1026, %v940
    %v1028 = vadd.f32 %v1027, %v942
    %v1029 = vadd.f32 %v1028, %v944
    %v1030 = vadd.f32 %v1029, %v946
    %v1031 = vadd.f32 %v1030, %v948
    %v1032 = vadd.f32 %v1031, %v950
    %v1033 = vadd.f32 %v1032, %v952
    %v1034 = vadd.f32 %v1033, %v954
    %v1035 = vadd.f32 %v1034, %v956
    %v1036 = vadd.f32 %v1035, %v958
    %v1037 = vadd.f32 %v1036, %v960
    %v1038 = vadd.f32 %v1037, %v962
    %v1039 = vadd.f32 %v1038, %v964
    %v1040 = vadd.f32 %v1039, %v966
    %v1041 = vadd.f32 %v1040, %v968
    %v1042 = vadd.f32 %v1041, %v970
    %v1043 = vadd.f32 %v1042, %v972
    %v1044 = vadd.f32 %v1043, %v974
    %v1045 = vadd.f32 %v1044, %v976
    %v1046 = vadd.f32 %v1045, %v978
    %v1047 = vrot.slane %v1046, 4
    %v1048 = vadd.f32 %v1046, %v1047
    %v1049 = vrot.slane %v1048, 2
    %v1050 = vadd.f32 %v1048, %v1049
    %v1051 = vrot.slane %v1050, 1
    %v1052 = vadd.f32 %v1050, %v1051
    %v1053 = vmul.f32 %v1015, %v912
    %v1054 = vmul.f32 %v1052, %v912
    %v1055 = vmul.f32 %v913, %v913
    %v1056 = vmul.f32 %v914, %v914
    %v1057 = vsub.f32 %v1053, %v1055
    %v1058 = vsub.f32 %v1054, %v1056
    %v1059 = vmax.f32 %v1057, 0.0
    %v1060 = vmax.f32 %v1058, 0.0
    %v1061 = vsub.f32 %v774, %v913
    %v1062 = vsub.f32 %v775, %v914
    %v1063 = vsub.f32 %v776, %v913
    %v1064 = vsub.f32 %v777, %v914
    %v1065 = vsub.f32 %v778, %v913
    %v1066 = vsub.f32 %v779, %v914
    %v1067 = vsub.f32 %v780, %v913
    %v1068 = vsub.f32 %v781, %v914
    %v1069 = vsub.f32 %v782, %v913
    %v1070 = vsub.f32 %v783, %v914
    %v1071 = vsub.f32 %v784, %v913
    %v1072 = vsub.f32 %v785, %v914
    %v1073 = vsub.f32 %v786, %v913
    %v1074 = vsub.f32 %v787, %v914
    %v1075 = vsub.f32 %v788, %v913
    %v1076 = vsub.f32 %v789, %v914
    %v1077 = vsub.f32 %v790, %v913
    %v1078 = vsub.f32 %v791, %v914
    %v1079 = vsub.f32 %v792, %v913
    %v1080 = vsub.f32 %v793, %v914
    %v1081 = vsub.f32 %v794, %v913
    %v1082 = vsub.f32 %v795, %v914
    %v1083 = vsub.f32 %v796, %v913
    %v1084 = vsub.f32 %v797, %v914
    %v1085 = vsub.f32 %v798, %v913
    %v1086 = vsub.f32 %v799, %v914
    %v1087 = vsub.f32 %v800, %v913
    %v1088 = vsub.f32 %v801, %v914
    %v1089 = vsub.f32 %v802, %v913
    %v1090 = vsub.f32 %v803, %v914
    %v1091 = vsub.f32 %v804, %v913
    %v1092 = vsub.f32 %v805, %v914
    %v1093 = vsub.f32 %v806, %v913
    %v1094 = vsub.f32 %v807, %v914
    %v1095 = vsub.f32 %v808, %v913
    %v1096 = vsub.f32 %v809, %v914
    %v1097 = vsub.f32 %v810, %v913
    %v1098 = vsub.f32 %v811, %v914
    %v1099 = vsub.f32 %v812, %v913
    %v1100 = vsub.f32 %v813, %v914
    %v1101 = vsub.f32 %v814, %v913
    %v1102 = vsub.f32 %v815, %v914
    %v1103 = vsub.f32 %v816, %v913
    %v1104 = vsub.f32 %v817, %v914
    %v1105 = vsub.f32 %v818, %v913
    %v1106 = vsub.f32 %v819, %v914
    %v1107 = vsub.f32 %v820, %v913
    %v1108 = vsub.f32 %v821, %v914
    %v1109 = vsub.f32 %v822, %v913
    %v1110 = vsub.f32 %v823, %v914
    %v1111 = vsub.f32 %v824, %v913
    %v1112 = vsub.f32 %v825, %v914
    %v1113 = vsub.f32 %v826, %v913
    %v1114 = vsub.f32 %v827, %v914
    %v1115 = vsub.f32 %v828, %v913
    %v1116 = vsub.f32 %v829, %v914
    %v1117 = vsub.f32 %v830, %v913
    %v1118 = vsub.f32 %v831, %v914
    %v1119 = vsub.f32 %v832, %v913
    %v1120 = vsub.f32 %v833, %v914
    %v1121 = vsub.f32 %v834, %v913
    %v1122 = vsub.f32 %v835, %v914
    %v1123 = vsub.f32 %v836, %v913
    %v1124 = vsub.f32 %v837, %v914
    %v1125 = vadd.f32 %v1059, 1e-05
    %v1126 = vadd.f32 %v1060, 1e-05
    %v1127 = vrsqrt.pop %v1125
    %v1128 = vrsqrt.pop %v1126
    %v1129 = vmul.f32 %v1061, %v1127
    %v1130 = vmul.f32 %v1062, %v1128
    %v1131 = vmul.f32 %v1063, %v1127
    %v1132 = vmul.f32 %v1064, %v1128
    %v1133 = vmul.f32 %v1065, %v1127
    %v1134 = vmul.f32 %v1066, %v1128
    %v1135 = vmul.f32 %v1067, %v1127
    %v1136 = vmul.f32 %v1068, %v1128
    %v1137 = vmul.f32 %v1069, %v1127
    %v1138 = vmul.f32 %v1070, %v1128
    %v1139 = vmul.f32 %v1071, %v1127
    %v1140 = vmul.f32 %v1072, %v1128
    %v1141 = vmul.f32 %v1073, %v1127
    %v1142 = vmul.f32 %v1074, %v1128
    %v1143 = vmul.f32 %v1075, %v1127
    %v1144 = vmul.f32 %v1076, %v1128
    %v1145 = vmul.f32 %v1077, %v1127
    %v1146 = vmul.f32 %v1078, %v1128
    %v1147 = vmul.f32 %v1079, %v1127
    %v1148 = vmul.f32 %v1080, %v1128
    %v1149 = vmul.f32 %v1081, %v1127
    %v1150 = vmul.f32 %v1082, %v1128
    %v1151 = vmul.f32 %v1083, %v1127
    %v1152 = vmul.f32 %v1084, %v1128
    %v1153 = vmul.f32 %v1085, %v1127
    %v1154 = vmul.f32 %v1086, %v1128
    %v1155 = vmul.f32 %v1087, %v1127
    %v1156 = vmul.f32 %v1088, %v1128
    %v1157 = vmul.f32 %v1089, %v1127
    %v1158 = vmul.f32 %v1090, %v1128
    %v1159 = vmul.f32 %v1091, %v1127
    %v1160 = vmul.f32 %v1092, %v1128
    %v1161 = vmul.f32 %v1093, %v1127
    %v1162 = vmul.f32 %v1094, %v1128
    %v1163 = vmul.f32 %v1095, %v1127
    %v1164 = vmul.f32 %v1096, %v1128
    %v1165 = vmul.f32 %v1097, %v1127
    %v1166 = vmul.f32 %v1098, %v1128
    %v1167 = vmul.f32 %v1099, %v1127
    %v1168 = vmul.f32 %v1100, %v1128
    %v1169 = vmul.f32 %v1101, %v1127
    %v1170 = vmul.f32 %v1102, %v1128
    %v1171 = vmul.f32 %v1103, %v1127
    %v1172 = vmul.f32 %v1104, %v1128
    %v1173 = vmul.f32 %v1105, %v1127
    %v1174 = vmul.f32 %v1106, %v1128
    %v1175 = vmul.f32 %v1107, %v1127
    %v1176 = vmul.f32 %v1108, %v1128
    %v1177 = vmul.f32 %v1109, %v1127
    %v1178 = vmul.f32 %v1110, %v1128
    %v1179 = vmul.f32 %v1111, %v1127
    %v1180 = vmul.f32 %v1112, %v1128
    %v1181 = vmul.f32 %v1113, %v1127
    %v1182 = vmul.f32 %v1114, %v1128
    %v1183 = vmul.f32 %v1115, %v1127
    %v1184 = vmul.f32 %v1116, %v1128
    %v1185 = vmul.f32 %v1117, %v1127
    %v1186 = vmul.f32 %v1118, %v1128
    %v1187 = vmul.f32 %v1119, %v1127
    %v1188 = vmul.f32 %v1120, %v1128
    %v1189 = vmul.f32 %v1121, %v1127
    %v1190 = vmul.f32 %v1122, %v1128
    %v1191 = vmul.f32 %v1123, %v1127
    %v1192 = vmul.f32 %v1124, %v1128
    %v1193 = vld [vmem:[#allocation2] sm:$0xff]
    %v1194 = vld [vmem:[#allocation2 + $0x8] sm:$0xff]
    %v1195 = vld [vmem:[#allocation2 + $0x10] sm:$0xff]
    %v1196 = vld [vmem:[#allocation2 + $0x18] sm:$0xff]
    %v1197 = vld [vmem:[#allocation2 + $0x20] sm:$0xff]
    %v1198 = vld [vmem:[#allocation2 + $0x28] sm:$0xff]
    %v1199 = vld [vmem:[#allocation2 + $0x30] sm:$0xff]
    %v1200 = vld [vmem:[#allocation2 + $0x38] sm:$0xff]
    %v1201 = vld [vmem:[#allocation2 + $0x40] sm:$0xff]
    %v1202 = vld [vmem:[#allocation2 + $0x48] sm:$0xff]
    %v1203 = vld [vmem:[#allocation2 + $0x50] sm:$0xff]
    %v1204 = vld [vmem:[#allocation2 + $0x58] sm:$0xff]
    %v1205 = vld [vmem:[#allocation2 + $0x60] sm:$0xff]
    %v1206 = vld [vmem:[#allocation2 + $0x68] sm:$0xff]
    %v1207 = vld [vmem:[#allocation2 + $0x70] sm:$0xff]
    %v1208 = vld [vmem:[#allocation2 + $0x78] sm:$0xff]
    %v1209 = vld [vmem:[#allocation2 + $0x80] sm:$0xff]
    %v1210 = vld [vmem:[#allocation2 + $0x88] sm:$0xff]
    %v1211 = vld [vmem:[#allocation2 + $0x90] sm:$0xff]
    %v1212 = vld [vmem:[#allocation2 + $0x98] sm:$0xff]
    %v1213 = vld [vmem:[#allocation2 + $0xa0] sm:$0xff]
    %v1214 = vld [vmem:[#allocation2 + $0xa8] sm:$0xff]
    %v1215 = vld [vmem:[#allocation2 + $0xb0] sm:$0xff]
    %v1216 = vld [vmem:[#allocation2 + $0xb8] sm:$0xff]
    %v1217 = vld [vmem:[#allocation2 + $0xc0] sm:$0xff]
    %v1218 = vld [vmem:[#allocation2 + $0xc8] sm:$0xff]
    %v1219 = vld [vmem:[#allocation2 + $0xd0] sm:$0xff]
    %v1220 = vld [vmem:[#allocation2 + $0xd8] sm:$0xff]
    %v1221 = vld [vmem:[#allocation2 + $0xe0] sm:$0xff]
    %v1222 = vld [vmem:[#allocation2 + $0xe8] sm:$0xff]
    %v1223 = vld [vmem:[#allocation2 + $0xf0] sm:$0xff]
    %v1224 = vld [vmem:[#allocation2 + $0xf8] sm:$0xff]
    %v1225 = vld [vmem:[#allocation2 + $0x100] sm:$0xff]
    %v1226 = vld [vmem:[#allocation2 + $0x108] sm:$0xff]
    %v1227 = vld [vmem:[#allocation2 + $0x110] sm:$0xff]
    %v1228 = vld [vmem:[#allocation2 + $0x118] sm:$0xff]
    %v1229 = vld [vmem:[#allocation2 + $0x120] sm:$0xff]
    %v1230 = vld [vmem:[#allocation2 + $0x128] sm:$0xff]
    %v1231 = vld [vmem:[#allocation2 + $0x130] sm:$0xff]
    %v1232 = vld [vmem:[#allocation2 + $0x138] sm:$0xff]
    %v1233 = vld [vmem:[#allocation2 + $0x140] sm:$0xff]
    %v1234 = vld [vmem:[#allocation2 + $0x148] sm:$0xff]
    %v1235 = vld [vmem:[#allocation2 + $0x150] sm:$0xff]
    %v1236 = vld [vmem:[#allocation2 + $0x158] sm:$0xff]
    %v1237 = vld [vmem:[#allocation2 + $0x160] sm:$0xff]
    %v1238 = vld [vmem:[#allocation2 + $0x168] sm:$0xff]
    %v1239 = vld [vmem:[#allocation2 + $0x170] sm:$0xff]
    %v1240 = vld [vmem:[#allocation2 + $0x178] sm:$0xff]
    %v1241 = vld [vmem:[#allocation2 + $0x180] sm:$0xff]
    %v1242 = vld [vmem:[#allocation2 + $0x188] sm:$0xff]
    %v1243 = vld [vmem:[#allocation2 + $0x190] sm:$0xff]
    %v1244 = vld [vmem:[#allocation2 + $0x198] sm:$0xff]
    %v1245 = vld [vmem:[#allocation2 + $0x1a0] sm:$0xff]
    %v1246 = vld [vmem:[#allocation2 + $0x1a8] sm:$0xff]
    %v1247 = vld [vmem:[#allocation2 + $0x1b0] sm:$0xff]
    %v1248 = vld [vmem:[#allocation2 + $0x1b8] sm:$0xff]
    %v1249 = vld [vmem:[#allocation2 + $0x1c0] sm:$0xff]
    %v1250 = vld [vmem:[#allocation2 + $0x1c8] sm:$0xff]
    %v1251 = vld [vmem:[#allocation2 + $0x1d0] sm:$0xff]
    %v1252 = vld [vmem:[#allocation2 + $0x1d8] sm:$0xff]
    %v1253 = vld [vmem:[#allocation2 + $0x1e0] sm:$0xff]
    %v1254 = vld [vmem:[#allocation2 + $0x1e8] sm:$0xff]
    %v1255 = vld [vmem:[#allocation2 + $0x1f0] sm:$0xff]
    %v1256 = vld [vmem:[#allocation2 + $0x1f8] sm:$0xff]
    %1257 = vset.pattern.permute.xlu0 3
    %1258 = vperm.xlu0 %1257, %v33
    %v1259 = vpop.permute.xlu0 %1258
    %1261 = vset.pattern.permute.xlu0 3
    %1262 = vperm.xlu0 %1261, %v34
    %v1263 = vpop.permute.xlu0 %1262
    %1265 = vset.pattern.permute.xlu0 3
    %1266 = vperm.xlu0 %1265, %v35
    %v1267 = vpop.permute.xlu0 %1266
    %1269 = vset.pattern.permute.xlu0 3
    %1270 = vperm.xlu0 %1269, %v36
    %v1271 = vpop.permute.xlu0 %1270
    %1273 = vset.pattern.permute.xlu0 3
    %1274 = vperm.xlu0 %1273, %v37
    %v1275 = vpop.permute.xlu0 %1274
    %1277 = vset.pattern.permute.xlu0 3
    %1278 = vperm.xlu0 %1277, %v38
    %v1279 = vpop.permute.xlu0 %1278
    %1281 = vset.pattern.permute.xlu0 3
    %1282 = vperm.xlu0 %1281, %v39
    %v1283 = vpop.permute.xlu0 %1282
    %1285 = vset.pattern.permute.xlu0 3
    %1286 = vperm.xlu0 %1285, %v40
    %v1287 = vpop.permute.xlu0 %1286
    %1289 = vset.pattern.permute.xlu0 3
    %1290 = vperm.xlu0 %1289, %v41
    %v1291 = vpop.permute.xlu0 %1290
    %1293 = vset.pattern.permute.xlu0 3
    %1294 = vperm.xlu0 %1293, %v42
    %v1295 = vpop.permute.xlu0 %1294
    %1297 = vset.pattern.permute.xlu0 3
    %1298 = vperm.xlu0 %1297, %v43
    %v1299 = vpop.permute.xlu0 %1298
    %1301 = vset.pattern.permute.xlu0 3
    %1302 = vperm.xlu0 %1301, %v44
    %v1303 = vpop.permute.xlu0 %1302
    %1305 = vset.pattern.permute.xlu0 3
    %1306 = vperm.xlu0 %1305, %v45
    %v1307 = vpop.permute.xlu0 %1306
    %1309 = vset.pattern.permute.xlu0 3
    %1310 = vperm.xlu0 %1309, %v46
    %v1311 = vpop.permute.xlu0 %1310
    %1313 = vset.pattern.permute.xlu0 3
    %1314 = vperm.xlu0 %1313, %v47
    %v1315 = vpop.permute.xlu0 %1314
    %1317 = vset.pattern.permute.xlu0 3
    %1318 = vperm.xlu0 %1317, %v48
    %v1319 = vpop.permute.xlu0 %1318
    %1321 = vset.pattern.permute.xlu0 3
    %1322 = vperm.xlu0 %1321, %v49
    %v1323 = vpop.permute.xlu0 %1322
    %1325 = vset.pattern.permute.xlu0 3
    %1326 = vperm.xlu0 %1325, %v50
    %v1327 = vpop.permute.xlu0 %1326
    %1329 = vset.pattern.permute.xlu0 3
    %1330 = vperm.xlu0 %1329, %v51
    %v1331 = vpop.permute.xlu0 %1330
    %1333 = vset.pattern.permute.xlu0 3
    %1334 = vperm.xlu0 %1333, %v52
    %v1335 = vpop.permute.xlu0 %1334
    %1337 = vset.pattern.permute.xlu0 3
    %1338 = vperm.xlu0 %1337, %v53
    %v1339 = vpop.permute.xlu0 %1338
    %1341 = vset.pattern.permute.xlu0 3
    %1342 = vperm.xlu0 %1341, %v54
    %v1343 = vpop.permute.xlu0 %1342
    %1345 = vset.pattern.permute.xlu0 3
    %1346 = vperm.xlu0 %1345, %v55
    %v1347 = vpop.permute.xlu0 %1346
    %1349 = vset.pattern.permute.xlu0 3
    %1350 = vperm.xlu0 %1349, %v56
    %v1351 = vpop.permute.xlu0 %1350
    %1353 = vset.pattern.permute.xlu0 3
    %1354 = vperm.xlu0 %1353, %v57
    %v1355 = vpop.permute.xlu0 %1354
    %1357 = vset.pattern.permute.xlu0 3
    %1358 = vperm.xlu0 %1357, %v58
    %v1359 = vpop.permute.xlu0 %1358
    %1361 = vset.pattern.permute.xlu0 3
    %1362 = vperm.xlu0 %1361, %v59
    %v1363 = vpop.permute.xlu0 %1362
    %1365 = vset.pattern.permute.xlu0 3
    %1366 = vperm.xlu0 %1365, %v60
    %v1367 = vpop.permute.xlu0 %1366
    %1369 = vset.pattern.permute.xlu0 3
    %1370 = vperm.xlu0 %1369, %v61
    %v1371 = vpop.permute.xlu0 %1370
    %1373 = vset.pattern.permute.xlu0 3
    %1374 = vperm.xlu0 %1373, %v62
    %v1375 = vpop.permute.xlu0 %1374
    %1377 = vset.pattern.permute.xlu0 3
    %1378 = vperm.xlu0 %1377, %v63
    %v1379 = vpop.permute.xlu0 %1378
    %1381 = vset.pattern.permute.xlu0 3
    %1382 = vperm.xlu0 %1381, %v64
    %v1383 = vpop.permute.xlu0 %1382
    %1385 = vmatprep.subr.mxu0 %v1130
    %1386 = vmatpush1.msra.mxu0 %v1129
    %1387 = vmatprep.subr.mxu0 %v1132
    %1388 = vmatpush1.msra.mxu0 %v1131
    %1389 = vmatprep.subr.mxu0 %v1134
    %1390 = vmatpush1.msra.mxu0 %v1133
    %1391 = vmatprep.subr.mxu0 %v1136
    %1392 = vmatpush1.msra.mxu0 %v1135
    %1393 = vmatprep.subr.mxu0 %v1138
    %1394 = vmatpush1.msra.mxu0 %v1137
    %1395 = vmatprep.subr.mxu0 %v1140
    %1396 = vmatpush1.msra.mxu0 %v1139
    %1397 = vmatprep.subr.mxu0 %v1142
    %1398 = vmatpush1.msra.mxu0 %v1141
    %1399 = vmatprep.subr.mxu0 %v1144
    %1400 = vmatpush1.msra.mxu0 %v1143
    %1401 = vmatprep.subr.mxu0 %v1146
    %1402 = vmatpush1.msra.mxu0 %v1145
    %1403 = vmatprep.subr.mxu0 %v1148
    %1404 = vmatpush1.msra.mxu0 %v1147
    %1405 = vmatprep.subr.mxu0 %v1150
    %1406 = vmatpush1.msra.mxu0 %v1149
    %1407 = vmatprep.subr.mxu0 %v1152
    %1408 = vmatpush1.msra.mxu0 %v1151
    %1409 = vmatprep.subr.mxu0 %v1154
    %1410 = vmatpush1.msra.mxu0 %v1153
    %1411 = vmatprep.subr.mxu0 %v1156
    %1412 = vmatpush1.msra.mxu0 %v1155
    %1413 = vmatprep.subr.mxu0 %v1158
    %1414 = vmatpush1.msra.mxu0 %v1157
    %1415 = vmatprep.subr.mxu0 %v1160
    %1416 = vmatpush1.msra.mxu0 %v1159
    %1417 = vmatprep.subr.mxu0 %v1162
    %1418 = vmatpush1.msra.mxu0 %v1161
    %1419 = vmatprep.subr.mxu0 %v1164
    %1420 = vmatpush1.msra.mxu0 %v1163
    %1421 = vmatprep.subr.mxu0 %v1166
    %1422 = vmatpush1.msra.mxu0 %v1165
    %1423 = vmatprep.subr.mxu0 %v1168
    %1424 = vmatpush1.msra.mxu0 %v1167
    %1425 = vmatprep.subr.mxu0 %v1170
    %1426 = vmatpush1.msra.mxu0 %v1169
    %1427 = vmatprep.subr.mxu0 %v1172
    %1428 = vmatpush1.msra.mxu0 %v1171
    %1429 = vmatprep.subr.mxu0 %v1174
    %1430 = vmatpush1.msra.mxu0 %v1173
    %1431 = vmatprep.subr.mxu0 %v1176
    %1432 = vmatpush1.msra.mxu0 %v1175
    %1433 = vmatprep.subr.mxu0 %v1178
    %1434 = vmatpush1.msra.mxu0 %v1177
    %1435 = vmatprep.subr.mxu0 %v1180
    %1436 = vmatpush1.msra.mxu0 %v1179
    %1437 = vmatprep.subr.mxu0 %v1182
    %1438 = vmatpush1.msra.mxu0 %v1181
    %1439 = vmatprep.subr.mxu0 %v1184
    %1440 = vmatpush1.msra.mxu0 %v1183
    %1441 = vmatprep.subr.mxu0 %v1186
    %1442 = vmatpush1.msra.mxu0 %v1185
    %1443 = vmatprep.subr.mxu0 %v1188
    %1444 = vmatpush1.msra.mxu0 %v1187
    %1445 = vmatprep.subr.mxu0 %v1190
    %1446 = vmatpush1.msra.mxu0 %v1189
    %1447 = vmatprep.subr.mxu0 %v1192
    %1448 = vmatpush1.msra.mxu0 %v1191
    %1449 = vmatprep.mubr.f32.mxu0 %v1194
    %1450 = vmatmul.mubr.f32.gmra.mrb[0].mxu0 %v1193
    %v1451 = vpop.f32.mrb[0].mxu0
    %v1452 = vadd.f32 %v1259, %v1451
    %v1453 = vpop.f32.mrb[0].mxu0
    %v1454 = vadd.f32 %v1259, %v1453
    %1455 = vmatprep.mubr.f32.mxu0 %v1196
    %1456 = vmatmul.mubr.f32.gmra.mrb[0].mxu0 %v1195
    %v1457 = vpop.f32.mrb[0].mxu0
    %v1458 = vadd.f32 %v1263, %v1457
    %v1459 = vpop.f32.mrb[0].mxu0
    %v1460 = vadd.f32 %v1263, %v1459
    %1461 = vmatprep.mubr.f32.mxu0 %v1198
    %1462 = vmatmul.mubr.f32.gmra.mrb[0].mxu0 %v1197
    %v1463 = vpop.f32.mrb[0].mxu0
    %v1464 = vadd.f32 %v1267, %v1463
    %v1465 = vpop.f32.mrb[0].mxu0
    %v1466 = vadd.f32 %v1267, %v1465
    %1467 = vmatprep.mubr.f32.mxu0 %v1200
    %1468 = vmatmul.mubr.f32.gmra.mrb[0].mxu0 %v1199
    %v1469 = vpop.f32.mrb[0].mxu0
    %v1470 = vadd.f32 %v1271, %v1469
    %v1471 = vpop.f32.mrb[0].mxu0
    %v1472 = vadd.f32 %v1271, %v1471
    %1473 = vmatprep.mubr.f32.mxu0 %v1202
    %1474 = vmatmul.mubr.f32.gmra.mrb[0].mxu0 %v1201
    %v1475 = vpop.f32.mrb[0].mxu0
    %v1476 = vadd.f32 %v1275, %v1475
    %v1477 = vpop.f32.mrb[0].mxu0
    %v1478 = vadd.f32 %v1275, %v1477
    %1479 = vmatprep.mubr.f32.mxu0 %v1204
    %1480 = vmatmul.mubr.f32.gmra.mrb[0].mxu0 %v1203
    %v1481 = vpop.f32.mrb[0].mxu0
    %v1482 = vadd.f32 %v1279, %v1481
    %v1483 = vpop.f32.mrb[0].mxu0
    %v1484 = vadd.f32 %v1279, %v1483
    %1485 = vmatprep.mubr.f32.mxu0 %v1206
    %1486 = vmatmul.mubr.f32.gmra.mrb[0].mxu0 %v1205
    %v1487 = vpop.f32.mrb[0].mxu0
    %v1488 = vadd.f32 %v1283, %v1487
    %v1489 = vpop.f32.mrb[0].mxu0
    %v1490 = vadd.f32 %v1283, %v1489
    %1491 = vmatprep.mubr.f32.mxu0 %v1208
    %1492 = vmatmul.mubr.f32.gmra.mrb[0].mxu0 %v1207
    %v1493 = vpop.f32.mrb[0].mxu0
    %v1494 = vadd.f32 %v1287, %v1493
    %v1495 = vpop.f32.mrb[0].mxu0
    %v1496 = vadd.f32 %v1287, %v1495
    %1497 = vmatprep.mubr.f32.mxu0 %v1210
    %1498 = vmatmul.mubr.f32.gmra.mrb[0].mxu0 %v1209
    %v1499 = vpop.f32.mrb[0].mxu0
    %v1500 = vadd.f32 %v1291, %v1499
    %v1501 = vpop.f32.mrb[0].mxu0
    %v1502 = vadd.f32 %v1291, %v1501
    %1503 = vmatprep.mubr.f32.mxu0 %v1212
    %1504 = vmatmul.mubr.f32.gmra.mrb[0].mxu0 %v1211
    %v1505 = vpop.f32.mrb[0].mxu0
    %v1506 = vadd.f32 %v1295, %v1505
    %v1507 = vpop.f32.mrb[0].mxu0
    %v1508 = vadd.f32 %v1295, %v1507
    %1509 = vmatprep.mubr.f32.mxu0 %v1214
    %1510 = vmatmul.mubr.f32.gmra.mrb[0].mxu0 %v1213
    %v1511 = vpop.f32.mrb[0].mxu0
    %v1512 = vadd.f32 %v1299, %v1511
    %v1513 = vpop.f32.mrb[0].mxu0
    %v1514 = vadd.f32 %v1299, %v1513
    %1515 = vmatprep.mubr.f32.mxu0 %v1216
    %1516 = vmatmul.mubr.f32.gmra.mrb[0].mxu0 %v1215
    %v1517 = vpop.f32.mrb[0].mxu0
    %v1518 = vadd.f32 %v1303, %v1517
    %v1519 = vpop.f32.mrb[0].mxu0
    %v1520 = vadd.f32 %v1303, %v1519
    %1521 = vmatprep.mubr.f32.mxu0 %v1218
    %1522 = vmatmul.mubr.f32.gmra.mrb[0].mxu0 %v1217
    %v1523 = vpop.f32.mrb[0].mxu0
    %v1524 = vadd.f32 %v1307, %v1523
    %v1525 = vpop.f32.mrb[0].mxu0
    %v1526 = vadd.f32 %v1307, %v1525
    %1527 = vmatprep.mubr.f32.mxu0 %v1220
    %1528 = vmatmul.mubr.f32.gmra.mrb[0].mxu0 %v1219
    %v1529 = vpop.f32.mrb[0].mxu0
    %v1530 = vadd.f32 %v1311, %v1529
    %v1531 = vpop.f32.mrb[0].mxu0
    %v1532 = vadd.f32 %v1311, %v1531
    %1533 = vmatprep.mubr.f32.mxu0 %v1222
    %1534 = vmatmul.mubr.f32.gmra.mrb[0].mxu0 %v1221
    %v1535 = vpop.f32.mrb[0].mxu0
    %v1536 = vadd.f32 %v1315, %v1535
    %v1537 = vpop.f32.mrb[0].mxu0
    %v1538 = vadd.f32 %v1315, %v1537
    %1539 = vmatprep.mubr.f32.mxu0 %v1224
    %1540 = vmatmul.mubr.f32.gmra.mrb[0].mxu0 %v1223
    %v1541 = vpop.f32.mrb[0].mxu0
    %v1542 = vadd.f32 %v1319, %v1541
    %v1543 = vpop.f32.mrb[0].mxu0
    %v1544 = vadd.f32 %v1319, %v1543
    %1545 = vmatprep.mubr.f32.mxu0 %v1226
    %1546 = vmatmul.mubr.f32.gmra.mrb[0].mxu0 %v1225
    %v1547 = vpop.f32.mrb[0].mxu0
    %v1548 = vadd.f32 %v1323, %v1547
    %v1549 = vpop.f32.mrb[0].mxu0
    %v1550 = vadd.f32 %v1323, %v1549
    %1551 = vmatprep.mubr.f32.mxu0 %v1228
    %1552 = vmatmul.mubr.f32.gmra.mrb[0].mxu0 %v1227
    %v1553 = vpop.f32.mrb[0].mxu0
    %v1554 = vadd.f32 %v1327, %v1553
    %v1555 = vpop.f32.mrb[0].mxu0
    %v1556 = vadd.f32 %v1327, %v1555
    %1557 = vmatprep.mubr.f32.mxu0 %v1230
    %1558 = vmatmul.mubr.f32.gmra.mrb[0].mxu0 %v1229
    %v1559 = vpop.f32.mrb[0].mxu0
    %v1560 = vadd.f32 %v1331, %v1559
    %v1561 = vpop.f32.mrb[0].mxu0
    %v1562 = vadd.f32 %v1331, %v1561
    %1563 = vmatprep.mubr.f32.mxu0 %v1232
    %1564 = vmatmul.mubr.f32.gmra.mrb[0].mxu0 %v1231
    %v1565 = vpop.f32.mrb[0].mxu0
    %v1566 = vadd.f32 %v1335, %v1565
    %v1567 = vpop.f32.mrb[0].mxu0
    %v1568 = vadd.f32 %v1335, %v1567
    %1569 = vmatprep.mubr.f32.mxu0 %v1234
    %1570 = vmatmul.mubr.f32.gmra.mrb[0].mxu0 %v1233
    %v1571 = vpop.f32.mrb[0].mxu0
    %v1572 = vadd.f32 %v1339, %v1571
    %v1573 = vpop.f32.mrb[0].mxu0
    %v1574 = vadd.f32 %v1339, %v1573
    %1575 = vmatprep.mubr.f32.mxu0 %v1236
    %1576 = vmatmul.mubr.f32.gmra.mrb[0].mxu0 %v1235
    %v1577 = vpop.f32.mrb[0].mxu0
    %v1578 = vadd.f32 %v1343, %v1577
    %v1579 = vpop.f32.mrb[0].mxu0
    %v1580 = vadd.f32 %v1343, %v1579
    %1581 = vmatprep.mubr.f32.mxu0 %v1238
    %1582 = vmatmul.mubr.f32.gmra.mrb[0].mxu0 %v1237
    %v1583 = vpop.f32.mrb[0].mxu0
    %v1584 = vadd.f32 %v1347, %v1583
    %v1585 = vpop.f32.mrb[0].mxu0
    %v1586 = vadd.f32 %v1347, %v1585
    %1587 = vmatprep.mubr.f32.mxu0 %v1240
    %1588 = vmatmul.mubr.f32.gmra.mrb[0].mxu0 %v1239
    %v1589 = vpop.f32.mrb[0].mxu0
    %v1590 = vadd.f32 %v1351, %v1589
    %v1591 = vpop.f32.mrb[0].mxu0
    %v1592 = vadd.f32 %v1351, %v1591
    %1593 = vmatprep.mubr.f32.mxu0 %v1242
    %1594 = vmatmul.mubr.f32.gmra.mrb[0].mxu0 %v1241
    %v1595 = vpop.f32.mrb[0].mxu0
    %v1596 = vadd.f32 %v1355, %v1595
    %v1597 = vpop.f32.mrb[0].mxu0
    %v1598 = vadd.f32 %v1355, %v1597
    %1599 = vmatprep.mubr.f32.mxu0 %v1244
    %1600 = vmatmul.mubr.f32.gmra.mrb[0].mxu0 %v1243
    %v1601 = vpop.f32.mrb[0].mxu0
    %v1602 = vadd.f32 %v1359, %v1601
    %v1603 = vpop.f32.mrb[0].mxu0
    %v1604 = vadd.f32 %v1359, %v1603
    %1605 = vmatprep.mubr.f32.mxu0 %v1246
    %1606 = vmatmul.mubr.f32.gmra.mrb[0].mxu0 %v1245
    %v1607 = vpop.f32.mrb[0].mxu0
    %v1608 = vadd.f32 %v1363, %v1607
    %v1609 = vpop.f32.mrb[0].mxu0
    %v1610 = vadd.f32 %v1363, %v1609
    %1611 = vmatprep.mubr.f32.mxu0 %v1248
    %1612 = vmatmul.mubr.f32.gmra.mrb[0].mxu0 %v1247
    %v1613 = vpop.f32.mrb[0].mxu0
    %v1614 = vadd.f32 %v1367, %v1613
    %v1615 = vpop.f32.mrb[0].mxu0
    %v1616 = vadd.f32 %v1367, %v1615
    %1617 = vmatprep.mubr.f32.mxu0 %v1250
    %1618 = vmatmul.mubr.f32.gmra.mrb[0].mxu0 %v1249
    %v1619 = vpop.f32.mrb[0].mxu0
    %v1620 = vadd.f32 %v1371, %v1619
    %v1621 = vpop.f32.mrb[0].mxu0
    %v1622 = vadd.f32 %v1371, %v1621
    %1623 = vmatprep.mubr.f32.mxu0 %v1252
    %1624 = vmatmul.mubr.f32.gmra.mrb[0].mxu0 %v1251
    %v1625 = vpop.f32.mrb[0].mxu0
    %v1626 = vadd.f32 %v1375, %v1625
    %v1627 = vpop.f32.mrb[0].mxu0
    %v1628 = vadd.f32 %v1375, %v1627
    %1629 = vmatprep.mubr.f32.mxu0 %v1254
    %1630 = vmatmul.mubr.f32.gmra.mrb[0].mxu0 %v1253
    %v1631 = vpop.f32.mrb[0].mxu0
    %v1632 = vadd.f32 %v1379, %v1631
    %v1633 = vpop.f32.mrb[0].mxu0
    %v1634 = vadd.f32 %v1379, %v1633
    %1635 = vmatprep.mubr.f32.mxu0 %v1256
    %1636 = vmatmul.mubr.f32.gmra.mrb[0].mxu0 %v1255
    %v1637 = vpop.f32.mrb[0].mxu0
    %v1638 = vadd.f32 %v1383, %v1637
    %v1639 = vpop.f32.mrb[0].mxu0
    %v1640 = vadd.f32 %v1383, %v1639
    %1641 = vdwg.mxu0
    %v1642 = vmax.f32 %v1452, 0.0
    %v1643 = vmax.f32 %v1454, 0.0
    %v1644 = vmax.f32 %v1458, 0.0
    %v1645 = vmax.f32 %v1460, 0.0
    %v1646 = vmax.f32 %v1464, 0.0
    %v1647 = vmax.f32 %v1466, 0.0
    %v1648 = vmax.f32 %v1470, 0.0
    %v1649 = vmax.f32 %v1472, 0.0
    %v1650 = vmax.f32 %v1476, 0.0
    %v1651 = vmax.f32 %v1478, 0.0
    %v1652 = vmax.f32 %v1482, 0.0
    %v1653 = vmax.f32 %v1484, 0.0
    %v1654 = vmax.f32 %v1488, 0.0
    %v1655 = vmax.f32 %v1490, 0.0
    %v1656 = vmax.f32 %v1494, 0.0
    %v1657 = vmax.f32 %v1496, 0.0
    %v1658 = vmax.f32 %v1500, 0.0
    %v1659 = vmax.f32 %v1502, 0.0
    %v1660 = vmax.f32 %v1506, 0.0
    %v1661 = vmax.f32 %v1508, 0.0
    %v1662 = vmax.f32 %v1512, 0.0
    %v1663 = vmax.f32 %v1514, 0.0
    %v1664 = vmax.f32 %v1518, 0.0
    %v1665 = vmax.f32 %v1520, 0.0
    %v1666 = vmax.f32 %v1524, 0.0
    %v1667 = vmax.f32 %v1526, 0.0
    %v1668 = vmax.f32 %v1530, 0.0
    %v1669 = vmax.f32 %v1532, 0.0
    %v1670 = vmax.f32 %v1536, 0.0
    %v1671 = vmax.f32 %v1538, 0.0
    %v1672 = vmax.f32 %v1542, 0.0
    %v1673 = vmax.f32 %v1544, 0.0
    %v1674 = vmax.f32 %v1548, 0.0
    %v1675 = vmax.f32 %v1550, 0.0
    %v1676 = vmax.f32 %v1554, 0.0
    %v1677 = vmax.f32 %v1556, 0.0
    %v1678 = vmax.f32 %v1560, 0.0
    %v1679 = vmax.f32 %v1562, 0.0
    %v1680 = vmax.f32 %v1566, 0.0
    %v1681 = vmax.f32 %v1568, 0.0
    %v1682 = vmax.f32 %v1572, 0.0
    %v1683 = vmax.f32 %v1574, 0.0
    %v1684 = vmax.f32 %v1578, 0.0
    %v1685 = vmax.f32 %v1580, 0.0
    %v1686 = vmax.f32 %v1584, 0.0
    %v1687 = vmax.f32 %v1586, 0.0
    %v1688 = vmax.f32 %v1590, 0.0
    %v1689 = vmax.f32 %v1592, 0.0
    %v1690 = vmax.f32 %v1596, 0.0
    %v1691 = vmax.f32 %v1598, 0.0
    %v1692 = vmax.f32 %v1602, 0.0
    %v1693 = vmax.f32 %v1604, 0.0
    %v1694 = vmax.f32 %v1608, 0.0
    %v1695 = vmax.f32 %v1610, 0.0
    %v1696 = vmax.f32 %v1614, 0.0
    %v1697 = vmax.f32 %v1616, 0.0
    %v1698 = vmax.f32 %v1620, 0.0
    %v1699 = vmax.f32 %v1622, 0.0
    %v1700 = vmax.f32 %v1626, 0.0
    %v1701 = vmax.f32 %v1628, 0.0
    %v1702 = vmax.f32 %v1632, 0.0
    %v1703 = vmax.f32 %v1634, 0.0
    %v1704 = vmax.f32 %v1638, 0.0
    %v1705 = vmax.f32 %v1640, 0.0
    %v1706 = vadd.f32 %v1642, %v1644
    %v1707 = vadd.f32 %v1706, %v1646
    %v1708 = vadd.f32 %v1707, %v1648
    %v1709 = vadd.f32 %v1708, %v1650
    %v1710 = vadd.f32 %v1709, %v1652
    %v1711 = vadd.f32 %v1710, %v1654
    %v1712 = vadd.f32 %v1711, %v1656
    %v1713 = vadd.f32 %v1712, %v1658
    %v1714 = vadd.f32 %v1713, %v1660
    %v1715 = vadd.f32 %v1714, %v1662
    %v1716 = vadd.f32 %v1715, %v1664
    %v1717 = vadd.f32 %v1716, %v1666
    %v1718 = vadd.f32 %v1717, %v1668
    %v1719 = vadd.f32 %v1718, %v1670
    %v1720 = vadd.f32 %v1719, %v1672
    %v1721 = vadd.f32 %v1720, %v1674
    %v1722 = vadd.f32 %v1721, %v1676
    %v1723 = vadd.f32 %v1722, %v1678
    %v1724 = vadd.f32 %v1723, %v1680
    %v1725 = vadd.f32 %v1724, %v1682
    %v1726 = vadd.f32 %v1725, %v1684
    %v1727 = vadd.f32 %v1726, %v1686
    %v1728 = vadd.f32 %v1727, %v1688
    %v1729 = vadd.f32 %v1728, %v1690
    %v1730 = vadd.f32 %v1729, %v1692
    %v1731 = vadd.f32 %v1730, %v1694
    %v1732 = vadd.f32 %v1731, %v1696
    %v1733 = vadd.f32 %v1732, %v1698
    %v1734 = vadd.f32 %v1733, %v1700
    %v1735 = vadd.f32 %v1734, %v1702
    %v1736 = vadd.f32 %v1735, %v1704
    %v1737 = vrot.slane %v1736, 4
    %v1738 = vadd.f32 %v1736, %v1737
    %v1739 = vrot.slane %v1738, 2
    %v1740 = vadd.f32 %v1738, %v1739
    %v1741 = vrot.slane %v1740, 1
    %v1742 = vadd.f32 %v1740, %v1741
    %v1743 = vadd.f32 %v1643, %v1645
    %v1744 = vadd.f32 %v1743, %v1647
    %v1745 = vadd.f32 %v1744, %v1649
    %v1746 = vadd.f32 %v1745, %v1651
    %v1747 = vadd.f32 %v1746, %v1653
    %v1748 = vadd.f32 %v1747, %v1655
    %v1749 = vadd.f32 %v1748, %v1657
    %v1750 = vadd.f32 %v1749, %v1659
    %v1751 = vadd.f32 %v1750, %v1661
    %v1752 = vadd.f32 %v1751, %v1663
    %v1753 = vadd.f32 %v1752, %v1665
    %v1754 = vadd.f32 %v1753, %v1667
    %v1755 = vadd.f32 %v1754, %v1669
    %v1756 = vadd.f32 %v1755, %v1671
    %v1757 = vadd.f32 %v1756, %v1673
    %v1758 = vadd.f32 %v1757, %v1675
    %v1759 = vadd.f32 %v1758, %v1677
    %v1760 = vadd.f32 %v1759, %v1679
    %v1761 = vadd.f32 %v1760, %v1681
    %v1762 = vadd.f32 %v1761, %v1683
    %v1763 = vadd.f32 %v1762, %v1685
    %v1764 = vadd.f32 %v1763, %v1687
    %v1765 = vadd.f32 %v1764, %v1689
    %v1766 = vadd.f32 %v1765, %v1691
    %v1767 = vadd.f32 %v1766, %v1693
    %v1768 = vadd.f32 %v1767, %v1695
    %v1769 = vadd.f32 %v1768, %v1697
    %v1770 = vadd.f32 %v1769, %v1699
    %v1771 = vadd.f32 %v1770, %v1701
    %v1772 = vadd.f32 %v1771, %v1703
    %v1773 = vadd.f32 %v1772, %v1705
    %v1774 = vrot.slane %v1773, 4
    %v1775 = vadd.f32 %v1773, %v1774
    %v1776 = vrot.slane %v1775, 2
    %v1777 = vadd.f32 %v1775, %v1776
    %v1778 = vrot.slane %v1777, 1
    %v1779 = vadd.f32 %v1777, %v1778
    %v1780 = vmul.f32 %v1742, %v912
    %v1781 = vmul.f32 %v1779, %v912
    %v1782 = vmul.f32 %v1642, %v1642
    %v1783 = vmul.f32 %v1643, %v1643
    %v1784 = vmul.f32 %v1644, %v1644
    %v1785 = vmul.f32 %v1645, %v1645
    %v1786 = vmul.f32 %v1646, %v1646
    %v1787 = vmul.f32 %v1647, %v1647
    %v1788 = vmul.f32 %v1648, %v1648
    %v1789 = vmul.f32 %v1649, %v1649
    %v1790 = vmul.f32 %v1650, %v1650
    %v1791 = vmul.f32 %v1651, %v1651
    %v1792 = vmul.f32 %v1652, %v1652
    %v1793 = vmul.f32 %v1653, %v1653
    %v1794 = vmul.f32 %v1654, %v1654
    %v1795 = vmul.f32 %v1655, %v1655
    %v1796 = vmul.f32 %v1656, %v1656
    %v1797 = vmul.f32 %v1657, %v1657
    %v1798 = vmul.f32 %v1658, %v1658
    %v1799 = vmul.f32 %v1659, %v1659
    %v1800 = vmul.f32 %v1660, %v1660
    %v1801 = vmul.f32 %v1661, %v1661
    %v1802 = vmul.f32 %v1662, %v1662
    %v1803 = vmul.f32 %v1663, %v1663
    %v1804 = vmul.f32 %v1664, %v1664
    %v1805 = vmul.f32 %v1665, %v1665
    %v1806 = vmul.f32 %v1666, %v1666
    %v1807 = vmul.f32 %v1667, %v1667
    %v1808 = vmul.f32 %v1668, %v1668
    %v1809 = vmul.f32 %v1669, %v1669
    %v1810 = vmul.f32 %v1670, %v1670
    %v1811 = vmul.f32 %v1671, %v1671
    %v1812 = vmul.f32 %v1672, %v1672
    %v1813 = vmul.f32 %v1673, %v1673
    %v1814 = vmul.f32 %v1674, %v1674
    %v1815 = vmul.f32 %v1675, %v1675
    %v1816 = vmul.f32 %v1676, %v1676
    %v1817 = vmul.f32 %v1677, %v1677
    %v1818 = vmul.f32 %v1678, %v1678
    %v1819 = vmul.f32 %v1679, %v1679
    %v1820 = vmul.f32 %v1680, %v1680
    %v1821 = vmul.f32 %v1681, %v1681
    %v1822 = vmul.f32 %v1682, %v1682
    %v1823 = vmul.f32 %v1683, %v1683
    %v1824 = vmul.f32 %v1684, %v1684
    %v1825 = vmul.f32 %v1685, %v1685
    %v1826 = vmul.f32 %v1686, %v1686
    %v1827 = vmul.f32 %v1687, %v1687
    %v1828 = vmul.f32 %v1688, %v1688
    %v1829 = vmul.f32 %v1689, %v1689
    %v1830 = vmul.f32 %v1690, %v1690
    %v1831 = vmul.f32 %v1691, %v1691
    %v1832 = vmul.f32 %v1692, %v1692
    %v1833 = vmul.f32 %v1693, %v1693
    %v1834 = vmul.f32 %v1694, %v1694
    %v1835 = vmul.f32 %v1695, %v1695
    %v1836 = vmul.f32 %v1696, %v1696
    %v1837 = vmul.f32 %v1697, %v1697
    %v1838 = vmul.f32 %v1698, %v1698
    %v1839 = vmul.f32 %v1699, %v1699
    %v1840 = vmul.f32 %v1700, %v1700
    %v1841 = vmul.f32 %v1701, %v1701
    %v1842 = vmul.f32 %v1702, %v1702
    %v1843 = vmul.f32 %v1703, %v1703
    %v1844 = vmul.f32 %v1704, %v1704
    %v1845 = vmul.f32 %v1705, %v1705
    %v1846 = vadd.f32 %v1782, %v1784
    %v1847 = vadd.f32 %v1846, %v1786
    %v1848 = vadd.f32 %v1847, %v1788
    %v1849 = vadd.f32 %v1848, %v1790
    %v1850 = vadd.f32 %v1849, %v1792
    %v1851 = vadd.f32 %v1850, %v1794
    %v1852 = vadd.f32 %v1851, %v1796
    %v1853 = vadd.f32 %v1852, %v1798
    %v1854 = vadd.f32 %v1853, %v1800
    %v1855 = vadd.f32 %v1854, %v1802
    %v1856 = vadd.f32 %v1855, %v1804
    %v1857 = vadd.f32 %v1856, %v1806
    %v1858 = vadd.f32 %v1857, %v1808
    %v1859 = vadd.f32 %v1858, %v1810
    %v1860 = vadd.f32 %v1859, %v1812
    %v1861 = vadd.f32 %v1860, %v1814
    %v1862 = vadd.f32 %v1861, %v1816
    %v1863 = vadd.f32 %v1862, %v1818
    %v1864 = vadd.f32 %v1863, %v1820
    %v1865 = vadd.f32 %v1864, %v1822
    %v1866 = vadd.f32 %v1865, %v1824
    %v1867 = vadd.f32 %v1866, %v1826
    %v1868 = vadd.f32 %v1867, %v1828
    %v1869 = vadd.f32 %v1868, %v1830
    %v1870 = vadd.f32 %v1869, %v1832
    %v1871 = vadd.f32 %v1870, %v1834
    %v1872 = vadd.f32 %v1871, %v1836
    %v1873 = vadd.f32 %v1872, %v1838
    %v1874 = vadd.f32 %v1873, %v1840
    %v1875 = vadd.f32 %v1874, %v1842
    %v1876 = vadd.f32 %v1875, %v1844
    %v1877 = vrot.slane %v1876, 4
    %v1878 = vadd.f32 %v1876, %v1877
    %v1879 = vrot.slane %v1878, 2
    %v1880 = vadd.f32 %v1878, %v1879
    %v1881 = vrot.slane %v1880, 1
    %v1882 = vadd.f32 %v1880, %v1881
    %v1883 = vadd.f32 %v1783, %v1785
    %v1884 = vadd.f32 %v1883, %v1787
    %v1885 = vadd.f32 %v1884, %v1789
    %v1886 = vadd.f32 %v1885, %v1791
    %v1887 = vadd.f32 %v1886, %v1793
    %v1888 = vadd.f32 %v1887, %v1795
    %v1889 = vadd.f32 %v1888, %v1797
    %v1890 = vadd.f32 %v1889, %v1799
    %v1891 = vadd.f32 %v1890, %v1801
    %v1892 = vadd.f32 %v1891, %v1803
    %v1893 = vadd.f32 %v1892, %v1805
    %v1894 = vadd.f32 %v1893, %v1807
    %v1895 = vadd.f32 %v1894, %v1809
    %v1896 = vadd.f32 %v1895, %v1811
    %v1897 = vadd.f32 %v1896, %v1813
    %v1898 = vadd.f32 %v1897, %v1815
    %v1899 = vadd.f32 %v1898, %v1817
    %v1900 = vadd.f32 %v1899, %v1819
    %v1901 = vadd.f32 %v1900, %v1821
    %v1902 = vadd.f32 %v1901, %v1823
    %v1903 = vadd.f32 %v1902, %v1825
    %v1904 = vadd.f32 %v1903, %v1827
    %v1905 = vadd.f32 %v1904, %v1829
    %v1906 = vadd.f32 %v1905, %v1831
    %v1907 = vadd.f32 %v1906, %v1833
    %v1908 = vadd.f32 %v1907, %v1835
    %v1909 = vadd.f32 %v1908, %v1837
    %v1910 = vadd.f32 %v1909, %v1839
    %v1911 = vadd.f32 %v1910, %v1841
    %v1912 = vadd.f32 %v1911, %v1843
    %v1913 = vadd.f32 %v1912, %v1845
    %v1914 = vrot.slane %v1913, 4
    %v1915 = vadd.f32 %v1913, %v1914
    %v1916 = vrot.slane %v1915, 2
    %v1917 = vadd.f32 %v1915, %v1916
    %v1918 = vrot.slane %v1917, 1
    %v1919 = vadd.f32 %v1917, %v1918
    %v1920 = vmul.f32 %v1882, %v912
    %v1921 = vmul.f32 %v1919, %v912
    %v1922 = vmul.f32 %v1780, %v1780
    %v1923 = vmul.f32 %v1781, %v1781
    %v1924 = vsub.f32 %v1920, %v1922
    %v1925 = vsub.f32 %v1921, %v1923
    %v1926 = vmax.f32 %v1924, 0.0
    %v1927 = vmax.f32 %v1925, 0.0
    %v1928 = vadd.f32 %v1926, 1e-05
    %v1929 = vadd.f32 %v1927, 1e-05
    %v1930 = vrsqrt.pop %v1928
    %v1931 = vrsqrt.pop %v1929
    %v1932 = vld [vmem:[%s3] sm:$0xf]
    %v1935 = vunpack.c.l.s4 1983009808
    %v1936 = vunpack.c.0.s8 %v1935
    %v1937 = vlaneseq
    %v1938 = vshrl.u32 %v1937, 7
    %v1939 = vsub.s32 %v1936, %v1938
    %v1940 = vrot.slane %v1932, %v1939
    %v1941 = vcombine.high %v1940, %v1940
    %1944 = vmatprep.subr.mxu0 %v1643
    %1945 = vmatpush1.msra.mxu0 %v1642
    %1946 = vmatprep.subr.mxu0 %v1645
    %1947 = vmatpush1.msra.mxu0 %v1644
    %1948 = vmatprep.subr.mxu0 %v1647
    %1949 = vmatpush1.msra.mxu0 %v1646
    %1950 = vmatprep.subr.mxu0 %v1649
    %1951 = vmatpush1.msra.mxu0 %v1648
    %1952 = vmatprep.subr.mxu0 %v1651
    %1953 = vmatpush1.msra.mxu0 %v1650
    %1954 = vmatprep.subr.mxu0 %v1653
    %1955 = vmatpush1.msra.mxu0 %v1652
    %1956 = vmatprep.subr.mxu0 %v1655
    %1957 = vmatpush1.msra.mxu0 %v1654
    %1958 = vmatprep.subr.mxu0 %v1657
    %1959 = vmatpush1.msra.mxu0 %v1656
    %1960 = vmatprep.subr.mxu0 %v1659
    %1961 = vmatpush1.msra.mxu0 %v1658
    %1962 = vmatprep.subr.mxu0 %v1661
    %1963 = vmatpush1.msra.mxu0 %v1660
    %1964 = vmatprep.subr.mxu0 %v1663
    %1965 = vmatpush1.msra.mxu0 %v1662
    %1966 = vmatprep.subr.mxu0 %v1665
    %1967 = vmatpush1.msra.mxu0 %v1664
    %1968 = vmatprep.subr.mxu0 %v1667
    %1969 = vmatpush1.msra.mxu0 %v1666
    %1970 = vmatprep.subr.mxu0 %v1669
    %1971 = vmatpush1.msra.mxu0 %v1668
    %1972 = vmatprep.subr.mxu0 %v1671
    %1973 = vmatpush1.msra.mxu0 %v1670
    %1974 = vmatprep.subr.mxu0 %v1673
    %1975 = vmatpush1.msra.mxu0 %v1672
    %1976 = vmatprep.subr.mxu0 %v1675
    %1977 = vmatpush1.msra.mxu0 %v1674
    %1978 = vmatprep.subr.mxu0 %v1677
    %1979 = vmatpush1.msra.mxu0 %v1676
    %1980 = vmatprep.subr.mxu0 %v1679
    %1981 = vmatpush1.msra.mxu0 %v1678
    %1982 = vmatprep.subr.mxu0 %v1681
    %1983 = vmatpush1.msra.mxu0 %v1680
    %1984 = vmatprep.subr.mxu0 %v1683
    %1985 = vmatpush1.msra.mxu0 %v1682
    %1986 = vmatprep.subr.mxu0 %v1685
    %1987 = vmatpush1.msra.mxu0 %v1684
    %1988 = vmatprep.subr.mxu0 %v1687
    %1989 = vmatpush1.msra.mxu0 %v1686
    %1990 = vmatprep.subr.mxu0 %v1689
    %1991 = vmatpush1.msra.mxu0 %v1688
    %1992 = vmatprep.subr.mxu0 %v1691
    %1993 = vmatpush1.msra.mxu0 %v1690
    %1994 = vmatprep.subr.mxu0 %v1693
    %1995 = vmatpush1.msra.mxu0 %v1692
    %1996 = vmatprep.subr.mxu0 %v1695
    %1997 = vmatpush1.msra.mxu0 %v1694
    %1998 = vmatprep.subr.mxu0 %v1697
    %1999 = vmatpush1.msra.mxu0 %v1696
    %2000 = vmatprep.subr.mxu0 %v1699
    %2001 = vmatpush1.msra.mxu0 %v1698
    %2002 = vmatprep.subr.mxu0 %v1701
    %2003 = vmatpush1.msra.mxu0 %v1700
    %2004 = vmatprep.subr.mxu0 %v1703
    %2005 = vmatpush1.msra.mxu0 %v1702
    %2006 = vmatprep.subr.mxu0 %v1705
    %2007 = vmatpush1.msra.mxu0 %v1704
    %2008 = vmatprep.mubr.f32.mxu0 %v1941
    %2009 = vmatmul.mubr.f32.gmra.mrb[0].mxu0 %v1940
    %v2010 = vpop.f32.mrb[0].mxu0
    %v2011 = vadd.f32 0.0, %v2010
    %v2012 = vpop.f32.mrb[0].mxu0
    %v2013 = vadd.f32 0.0, %v2012
    %2014 = vdwg.mxu0
    %2015 = vset.pattern.permute.xlu0 5
    %2016 = vperm.xlu0 %2015, %v33
    %v2017 = vpop.permute.xlu0 %2016
    %v2019 = vmul.f32 %v2017, %v1780
    %v2020 = vmul.f32 %v2017, %v1781
    %v2021 = vsub.f32 %v2011, %v2019
    %v2022 = vsub.f32 %v2013, %v2020
    %v2023 = vmul.f32 %v2021, %v1930
    %v2024 = vmul.f32 %v2022, %v1931
    %2025 = vset.pattern.permute.xlu0 4
    %2026 = vperm.xlu0 %2025, %v33
    %v2027 = vpop.permute.xlu0 %2026
    %v2029 = vadd.f32 %v2023, %v2027
    %v2030 = vadd.f32 %v2024, %v2027
    %v2033 = vcombine.low %v2029, %v2030
    %v2035 = vunpack.c.l.s4 1983009808
    %v2036 = vunpack.c.0.s8 %v2035
    %v2037 = vlaneseq
    %v2038 = vshrl.u32 %v2037, 7
    %v2039 = vsub.s32 %v2036, %v2038
    %v2040 = vrot.slane %v2033, %v2039
    %2042 = vst [vmem:[#allocation5] sm:$0xf] %v2040
    // Predicated region
    $region22: #{tpu_custom_call.1} parent=1 // pred_check
      _
    $region23: #{tpu_custom_call.1} parent=1 // pred_check_branch
      %2044 = sbr.rel (0) target = $region25
    $region24: #{tpu_custom_call.1} parent=1 // pred_region
      %s2046 = ssub.s32 64, 64
      %2047 = vsyncadd [#allocation4], %s2046
      %s2049 = sshll.u32 [#allocation5], 4
      %s2050 = int_to_ptr.vmem [resolvable:$true] %s2049
      %2052 = dma.vmem_to_hbm [thread:$0]  %s2050, 64, %s4, [#allocation4]
    $region25: #{tpu_custom_call.1} parent=1 // pred_fallthru
      _
    // Predicated region
    $region26: #{tpu_custom_call.1} parent=1 // pred_check
      _
    $region27: #{tpu_custom_call.1} parent=1 // pred_check_branch
      %2054 = sbr.rel (0) target = $region29
    $region28: #{tpu_custom_call.1} parent=1 // pred_region
      %2055 = dma.done [#allocation4], 64
    $region29: #{tpu_custom_call.1} parent=1 // pred_fallthru
      _
    %2056 = vsyncpa [#allocation3], 1
    %2057 = vsyncpa [#allocation4], 1

</llo_original>
